<compile_context>
chip_gen: v6e
topology: v6e:2x2x1
jax: 0.10.0
libtpu: 0.0.40
codegen_flags: <defaults>
</compile_context>

<pallas_src>
import functools
import math

import jax
import jax.numpy as jnp
from jax.experimental import pallas as pl
from jax.experimental.pallas import tpu as pltpu


# ---------------------------------------------------------------------------
# numerics helpers
# ---------------------------------------------------------------------------
def _layernorm(x, gamma, beta, eps=1e-5, true_n=None):
    """LayerNorm over the last dim.  If true_n < x.shape[-1], columns >= true_n
    are zero padding: stats are computed over the first true_n columns only
    (padded gamma/beta are zero, so padded outputs are exactly zero)."""
    x = x.astype(jnp.float32)
    n = x.shape[-1]
    if true_n is None or true_n == n:
        mu = jnp.mean(x, axis=-1, keepdims=True)
        xc = x - mu
        var = jnp.mean(xc * xc, axis=-1, keepdims=True)
    else:
        mask = (jax.lax.broadcasted_iota(jnp.int32, (1, n), 1) < true_n
                ).astype(jnp.float32)
        mu = jnp.sum(x * mask, axis=-1, keepdims=True) / true_n
        xc = (x - mu) * mask
        var = jnp.sum(xc * xc, axis=-1, keepdims=True) / true_n
    return (xc * jax.lax.rsqrt(var + eps) * gamma.astype(jnp.float32)
            + beta.astype(jnp.float32))


def _gelu_exact(x):
    # PyTorch nn.GELU() default = exact erf form
    return 0.5 * x * (1.0 + jax.lax.erf(x * (1.0 / math.sqrt(2.0))))


# ---------------------------------------------------------------------------
# Kernel 1: spatial component analyzer + weighted component sum + K/V proj
# grid = (B, Np // np_t)
# ---------------------------------------------------------------------------
def fuse_kernel(*refs, num_components, h1_true):
    qas_ref, pos_ref = refs[0], refs[1]
    comp_refs = refs[2:2 + num_components]
    (w1a_ref, w1b_ref, b1_ref, g1_ref, be1_ref,
     w2_ref, b2_ref, g2_ref, be2_ref,
     wkv_ref, bkv_ref) = refs[2 + num_components:2 + num_components + 11]
    fused_ref, weights_ref, kv_ref = refs[-3:]

    # bf16 operands into the MXU; f32 accumulation.
    x = qas_ref[0].astype(jnp.bfloat16)                # [tn, D]
    pos = pos_ref[0].astype(jnp.bfloat16)              # [tn, 3]

    # Linear(D+3, H1) split so the big operand stays lane-dense (no D+3 pad);
    # H1 is padded to a 128-multiple in the wrapper (zero columns).
    h = (jnp.dot(x, w1a_ref[...], preferred_element_type=jnp.float32)
         + jnp.dot(pos, w1b_ref[...], preferred_element_type=jnp.float32)
         + b1_ref[...].astype(jnp.float32))
    h = _layernorm(h, g1_ref[...], be1_ref[...], true_n=h1_true)
    h = _gelu_exact(h)                                 # Dropout(0.1): identity (eval)
    logits = (jnp.dot(h.astype(jnp.bfloat16), w2_ref[...],
                      preferred_element_type=jnp.float32)
              + b2_ref[...].astype(jnp.float32))
    logits = _layernorm(logits, g2_ref[...], be2_ref[...])

    # exact softmax (these weights are a user-visible output -> no approx recip)
    m = jnp.max(logits, axis=-1, keepdims=True)
    e = jnp.exp(logits - m)
    w = e / jnp.sum(e, axis=-1, keepdims=True)         # [tn, K] f32

    # lane-dense store: weights emitted as [K, tn] (Np on the lane axis);
    # the wrapper transposes once for the [B, Np, K] public API.
    weights_ref[0] = w.T.astype(weights_ref.dtype)

    # weighted sum of the K components (K small & static -> unrolled on VPU, f32)
    fused = comp_refs[0][0].astype(jnp.float32) * w[:, 0:1]
    for c in range(1, num_components):
        fused = fused + comp_refs[c][0].astype(jnp.float32) * w[:, c:c + 1]
    fused_ref[0] = fused.astype(fused_ref.dtype)

    # K/V projection hoisted out of the attention kv loop: computed exactly once
    # per point tile and streamed to the attention kernel as bf16.
    kv = (jnp.dot(fused.astype(jnp.bfloat16), wkv_ref[...],
                  preferred_element_type=jnp.float32)
          + bkv_ref[...].astype(jnp.float32))          # [tn, 2D]
    kv_ref[0] = kv.astype(kv_ref.dtype)


# ---------------------------------------------------------------------------
# Kernel 2: flash-style multi-head self-attention + residual + final LN
# grid = (B, Np // tq, Np // tk), kv axis innermost ("arbitrary")
# ---------------------------------------------------------------------------
def attn_kernel(fq_ref, kv_ref,
                wq_ref, bq_ref, wo_ref, bo_ref, gf_ref, bf_ref,
                o_ref, q_sc, m_sc, l_sc, acc_sc, *, num_heads):
    ki = pl.program_id(2)
    nk = pl.num_programs(2)

    _, tq, D = fq_ref.shape
    _, tk, _ = kv_ref.shape
    H = num_heads
    hd = D // H
    scale = 1.0 / math.sqrt(hd)

    @pl.when(ki == 0)
    def _init():
        # Q projection once per q-tile, cached head-major, pre-scaled, bf16.
        q = (jnp.dot(fq_ref[0].astype(jnp.bfloat16), wq_ref[...],
                     preferred_element_type=jnp.float32)
             + bq_ref[...].astype(jnp.float32)) * scale          # [tq, D] f32
        # single retile: [tq, D] -> [tq, H, hd] -> [H, tq, hd]
        q_sc[...] = jnp.swapaxes(q.reshape(tq, H, hd), 0, 1).astype(q_sc.dtype)
        m_sc[...] = jnp.full_like(m_sc, -jnp.inf)
        l_sc[...] = jnp.zeros_like(l_sc)
        acc_sc[...] = jnp.zeros_like(acc_sc)

    # K/V tile: already projected (bf16) -> one retile for all heads of K and V.
    kv = kv_ref[0]                                                # [tk, 2D] bf16
    kvh = jnp.swapaxes(kv.reshape(tk, 2 * H, hd), 0, 1)           # [2H, tk, hd]
    kh = kvh[:H]                                                  # [H, tk, hd]
    vh = kvh[H:]                                                  # [H, tk, hd]

    # all heads in one batched matmul (bf16 operands, f32 accumulation)
    s = jnp.einsum('hqd,hkd->hqk', q_sc[...], kh,
                   preferred_element_type=jnp.float32)            # [H, tq, tk]

    # online softmax update
    m_prev = m_sc[...]
    m_new = jnp.maximum(m_prev, jnp.max(s, axis=-1, keepdims=True))
    alpha = jnp.exp(m_prev - m_new)
    p = jnp.exp(s - m_new)
    l_sc[...] = alpha * l_sc[...] + jnp.sum(p, axis=-1, keepdims=True)
    acc_sc[...] = alpha * acc_sc[...] + jnp.einsum(
        'hqk,hkd->hqd', p.astype(jnp.bfloat16), vh,
        preferred_element_type=jnp.float32)
    m_sc[...] = m_new

    @pl.when(ki == nk - 1)
    def _finalize():
        attn = acc_sc[...] * pl.reciprocal(l_sc[...], approx=True)   # [H, tq, hd]
        attn2 = jnp.swapaxes(attn, 0, 1).reshape(tq, D)              # one retile
        proj = (jnp.dot(attn2.astype(jnp.bfloat16), wo_ref[...],
                        preferred_element_type=jnp.float32)
                + bo_ref[...].astype(jnp.float32))
        # residual load hoisted out of the hot kv loop: only read here.
        fq = fq_ref[0].astype(jnp.float32)
        y = _layernorm(proj + fq, gf_ref[...], bf_ref[...])
        o_ref[0] = y.astype(o_ref.dtype)


# ---------------------------------------------------------------------------
# wrapper
# ---------------------------------------------------------------------------
_FUSE_PARAMS = ("w1a", "w1b", "b1", "g1", "be1", "w2", "b2", "g2", "be2",
                "wkv", "bkv")
_ATTN_PARAMS = ("wq", "bq", "wo", "bo", "gf", "bf")
_BF16_WEIGHTS = ("w1a", "w1b", "w2", "wkv", "wq", "wo")   # matmul operands


def _tpu_vmem_bytes():
    """Physical per-core VMEM; conservative 64 MiB fallback (v7x) if unknown."""
    try:
        info = pltpu.get_tpu_info()
        cap = getattr(info, "vmem_capacity_bytes", None)
        if cap:
            return int(cap)
    except Exception:
        pass
    return 64 * 1024 * 1024


def _pick_tile(n, target):
    """Largest 128-multiple tile <= target that divides n, else the full extent."""
    if n >= 128 and n % 128 == 0:
        t = max(128, (min(target, n) // 128) * 128)
        while n % t:
            t -= 128
        return t
    return n


def _prepare_params(params):
    """Pad the analyzer hidden dim to a 128-multiple and pre-cast the matmul
    weight matrices to bf16 (resident in VMEM -> half footprint, MXU-ready)."""
    p = dict(params)
    h1_true = int(p["w1a"].shape[1])
    h1_pad = -(-h1_true // 128) * 128
    if h1_pad != h1_true:
        pad = h1_pad - h1_true
        p["w1a"] = jnp.pad(p["w1a"], ((0, 0), (0, pad)))
        p["w1b"] = jnp.pad(p["w1b"], ((0, 0), (0, pad)))
        for n in ("b1", "g1", "be1"):              # zero gamma/beta on padding
            p[n] = jnp.pad(p[n], ((0, 0), (0, pad)))
        p["w2"] = jnp.pad(p["w2"], ((0, pad), (0, 0)))
    for n in _BF16_WEIGHTS:
        p[n] = p[n].astype(jnp.bfloat16)
    return p, h1_true


def spatial_aware_visual_fusion(visual_components, question_aware_spatial,
                                full_point_pos, params, num_heads):
    B, Np, D = question_aware_spatial.shape
    K = len(visual_components)
    act_dtype = question_aware_spatial.dtype
    if D % num_heads != 0:
        raise ValueError("hidden_dim must be divisible by num_heads")
    if Np % 128 != 0 and Np > 2048:
        raise ValueError("large Np must be a multiple of 128 (pad the points)")
    H, hd = num_heads, D // num_heads

    p, h1_true = _prepare_params(params)
    fuse_p = [p[n] for n in _FUSE_PARAMS]
    attn_p = [p[n] for n in _ATTN_PARAMS]

    # ------------------ generation-aware VMEM budget / tile targets --------
    vmem_cap = _tpu_vmem_bytes()
    vmem_limit = min(int(0.75 * vmem_cap), 100 * 1024 * 1024)   # never the full 64 MiB on v7x
    base_target = 512 if vmem_cap > 64 * 1024 * 1024 else 256   # v5e/v6e vs v7x

    # ---------------- kernel 1: analyzer + weighted fusion + kv ------------
    itemsize = jnp.dtype(act_dtype).itemsize
    # double-buffered streamed bytes per point row: (K+1) D-wide inputs + pos +
    # fused out + bf16 kv out + weights out
    per_row = ((K + 2) * D + 3) * itemsize + 2 * D * 2 + K * 4
    cap_rows = max(128, ((int(0.35 * vmem_limit) // (2 * per_row)) // 128) * 128)
    np_t = _pick_tile(Np, min(base_target, cap_rows))
    grid1 = (B, Np // np_t)

    in_specs1 = (
        [pl.BlockSpec((1, np_t, D), lambda b, n: (b, n, 0)),
         pl.BlockSpec((1, np_t, 3), lambda b, n: (b, n, 0))]
        + [pl.BlockSpec((1, np_t, D), lambda b, n: (b, n, 0)) for _ in range(K)]
        # constant block index -> parameters stay resident in VMEM (no re-DMA)
        + [pl.BlockSpec(w.shape, lambda b, n: (0, 0)) for w in fuse_p]
    )
    out_specs1 = [
        pl.BlockSpec((1, np_t, D), lambda b, n: (b, n, 0)),
        pl.BlockSpec((1, K, np_t), lambda b, n: (b, 0, n)),     # lane-dense store
        pl.BlockSpec((1, np_t, 2 * D), lambda b, n: (b, n, 0)),
    ]
    out_shape1 = [
        jax.ShapeDtypeStruct((B, Np, D), act_dtype),
        jax.ShapeDtypeStruct((B, K, Np), jnp.float32),
        jax.ShapeDtypeStruct((B, Np, 2 * D), jnp.bfloat16),
    ]
    fused, weights_kn, kv = pl.pallas_call(
        functools.partial(fuse_kernel, num_components=K, h1_true=h1_true),
        grid=grid1,
        in_specs=in_specs1,
        out_specs=out_specs1,
        out_shape=out_shape1,
        compiler_params=pltpu.CompilerParams(
            dimension_semantics=("parallel", "parallel"),
            vmem_limit_bytes=vmem_limit),
    )(question_aware_spatial, full_point_pos, *visual_components, *fuse_p)

    # ---------------- kernel 2: flash self-attention + final LN ------------
    # shrink attention tiles until s/p + streams + scratch fit the budget
    tgt = base_target
    budget = int(0.4 * vmem_limit)
    while tgt > 128 and (H * tgt * tgt * 6 + 8 * tgt * D * 4 + 4 * tgt * D * 2) > budget:
        tgt -= 128
    tq = _pick_tile(Np, tgt)
    tk = _pick_tile(Np, tgt)
    grid2 = (B, Np // tq, Np // tk)

    in_specs2 = (
        [pl.BlockSpec((1, tq, D), lambda b, qi, ki: (b, qi, 0)),       # residual / Q source
         pl.BlockSpec((1, tk, 2 * D), lambda b, qi, ki: (b, ki, 0))]   # pre-projected K/V (bf16)
        + [pl.BlockSpec(w.shape, lambda b, qi, ki: (0, 0)) for w in attn_p]
    )
    out_specs2 = pl.BlockSpec((1, tq, D), lambda b, qi, ki: (b, qi, 0))
    out_shape2 = jax.ShapeDtypeStruct((B, Np, D), act_dtype)
    scratch2 = [
        pltpu.VMEM((H, tq, hd), jnp.bfloat16),   # cached, scaled Q (head-major)
        pltpu.VMEM((H, tq, 1), jnp.float32),     # running max
        pltpu.VMEM((H, tq, 1), jnp.float32),     # running denominator
        pltpu.VMEM((H, tq, hd), jnp.float32),    # output accumulator
    ]
    out = pl.pallas_call(
        functools.partial(attn_kernel, num_heads=num_heads),
        grid=grid2,
        in_specs=in_specs2,
        out_specs=out_specs2,
        out_shape=out_shape2,
        scratch_shapes=scratch2,
        compiler_params=pltpu.CompilerParams(
            dimension_semantics=("parallel", "parallel", "arbitrary"),
            vmem_limit_bytes=vmem_limit),
    )(fused, kv, *attn_p)

    # PyTorch API returns [B, Np, K]; single cheap transpose outside the kernel.
    weights = jnp.transpose(weights_kn, (0, 2, 1))
    return out, weights


# ---------------------------------------------------------------------------
# pure-JAX reference (correctness check, raw f32 params)
# ---------------------------------------------------------------------------
def reference(visual_components, qas, pos, P, num_heads):
    h = qas @ P["w1a"] + pos @ P["w1b"] + P["b1"]
    h = _layernorm(h, P["g1"], P["be1"])
    h = _gelu_exact(h)
    lg = h @ P["w2"] + P["b2"]
    lg = _layernorm(lg, P["g2"], P["be2"])
    w = jax.nn.softmax(lg, axis=-1)                                # [B, Np, K]
    stacked = jnp.stack(visual_components, axis=3)                 # [B, Np, D, K]
    fused = (stacked * w[:, :, None, :]).sum(axis=3)               # [B, Np, D]

    B, Np, D = fused.shape
    hd = D // num_heads
    q = fused @ P["wq"] + P["bq"]
    kv = fused @ P["wkv"] + P["bkv"]
    k, v = kv[..., :D], kv[..., D:]
    qh = q.reshape(B, Np, num_heads, hd).transpose(0, 2, 1, 3)
    kh = k.reshape(B, Np, num_heads, hd).transpose(0, 2, 1, 3)
    vh = v.reshape(B, Np, num_heads, hd).transpose(0, 2, 1, 3)
    s = jnp.einsum("bhnd,bhmd->bhnm", qh, kh) / math.sqrt(hd)
    pw = jax.nn.softmax(s, axis=-1)
    a = jnp.einsum("bhnm,bhmd->bhnd", pw, vh).transpose(0, 2, 1, 3).reshape(B, Np, D)
    attn_out = a @ P["wo"] + P["bo"]
    y = _layernorm(attn_out + fused, P["gf"], P["bf"])
    return y, w


# ---------------------------------------------------------------------------
def make_params(key, D, K):
    H1 = (D + 3) // 2
    ks = jax.random.split(key, 11)
    s = 0.05
    return {
        # analyzer Linear(D+3, H1) split into feature part (D) and xyz part (3)
        "w1a": s * jax.random.normal(ks[0], (D, H1), jnp.float32),
        "w1b": s * jax.random.normal(ks[1], (3, H1), jnp.float32),
        "b1": s * jax.random.normal(ks[2], (1, H1), jnp.float32),
        "g1": jnp.ones((1, H1), jnp.float32),
        "be1": jnp.zeros((1, H1), jnp.float32),
        "w2": s * jax.random.normal(ks[3], (H1, K), jnp.float32),
        "b2": s * jax.random.normal(ks[4], (1, K), jnp.float32),
        "g2": jnp.ones((1, K), jnp.float32),
        "be2": jnp.zeros((1, K), jnp.float32),
        # MHA: wq = in_proj_weight[:D].T ; wkv = in_proj_weight[D:].T packed [D, 2D]
        "wq": s * jax.random.normal(ks[5], (D, D), jnp.float32),
        "bq": s * jax.random.normal(ks[6], (1, D), jnp.float32),
        "wkv": s * jax.random.normal(ks[7], (D, 2 * D), jnp.float32),
        "bkv": s * jax.random.normal(ks[8], (1, 2 * D), jnp.float32),
        "wo": s * jax.random.normal(ks[9], (D, D), jnp.float32),
        "bo": s * jax.random.normal(ks[10], (1, D), jnp.float32),
        "gf": jnp.ones((1, D), jnp.float32),
        "bf": jnp.zeros((1, D), jnp.float32),
    }


if __name__ == "__main__":
    B, Np, D, K, num_heads = 2, 16, 32, 7, 8   # small shapes, D % num_heads == 0

    key = jax.random.PRNGKey(0)
    kdata, kparam = jax.random.split(key)
    ks = jax.random.split(kdata, K + 2)
    visual_components = [jax.random.normal(ks[i], (B, Np, D), jnp.float32)
                         for i in range(K)]
    question_aware_spatial = jax.random.normal(ks[K], (B, Np, D), jnp.float32)
    full_point_pos = jax.random.normal(ks[K + 1], (B, Np, 3), jnp.float32)

    params = make_params(kparam, D, K)

    fused, weights = spatial_aware_visual_fusion(
        visual_components, question_aware_spatial, full_point_pos, params, num_heads)
    jax.block_until_ready((fused, weights))

    ref_fused, ref_w = reference(visual_components, question_aware_spatial,
                                 full_point_pos, params, num_heads)
    assert weights.shape == (B, Np, K)
    assert fused.shape == (B, Np, D)
    # bf16 MXU operands -> slightly looser tolerance than the f32 reference
    assert jnp.allclose(weights, ref_w, atol=2e-2, rtol=2e-2)
    assert jnp.allclose(fused, ref_fused, atol=3e-2, rtol=3e-2)

    print("KERNEL_OK")
</pallas_src>

<mosaic_0001>
module attributes {stable_mosaic.version = 11 : i64} {
  func.func @fuse_kernel(%arg0: i32, %arg1: i32, %arg2: memref<1x16x32xf32, #tpu.memory_space<vmem>>, %arg3: memref<1x16x3xf32, #tpu.memory_space<vmem>>, %arg4: memref<1x16x32xf32, #tpu.memory_space<vmem>>, %arg5: memref<1x16x32xf32, #tpu.memory_space<vmem>>, %arg6: memref<1x16x32xf32, #tpu.memory_space<vmem>>, %arg7: memref<1x16x32xf32, #tpu.memory_space<vmem>>, %arg8: memref<1x16x32xf32, #tpu.memory_space<vmem>>, %arg9: memref<1x16x32xf32, #tpu.memory_space<vmem>>, %arg10: memref<1x16x32xf32, #tpu.memory_space<vmem>>, %arg11: memref<32x128xbf16, #tpu.memory_space<vmem>>, %arg12: memref<3x128xbf16, #tpu.memory_space<vmem>>, %arg13: memref<1x128xf32, #tpu.memory_space<vmem>>, %arg14: memref<1x128xf32, #tpu.memory_space<vmem>>, %arg15: memref<1x128xf32, #tpu.memory_space<vmem>>, %arg16: memref<128x7xbf16, #tpu.memory_space<vmem>>, %arg17: memref<1x7xf32, #tpu.memory_space<vmem>>, %arg18: memref<1x7xf32, #tpu.memory_space<vmem>>, %arg19: memref<1x7xf32, #tpu.memory_space<vmem>>, %arg20: memref<32x64xbf16, #tpu.memory_space<vmem>>, %arg21: memref<1x64xf32, #tpu.memory_space<vmem>>, %arg22: memref<1x16x32xf32, #tpu.memory_space<vmem>>, %arg23: memref<1x7x16xf32, #tpu.memory_space<vmem>>, %arg24: memref<1x16x64xbf16, #tpu.memory_space<vmem>>) attributes {dimension_semantics = [#tpu.dimension_semantics<parallel>, #tpu.dimension_semantics<parallel>], iteration_bounds = array<i64: 2, 1>, scalar_prefetch = 0 : i64, scratch_operands = 0 : i64, tpu.core_type = #tpu.core_type<tc>, window_params = [{transform_indices = @transform_0, window_bounds = array<i64: 1, 16, 32>}, {transform_indices = @transform_1, window_bounds = array<i64: 1, 16, 3>}, {transform_indices = @transform_2, window_bounds = array<i64: 1, 16, 32>}, {transform_indices = @transform_3, window_bounds = array<i64: 1, 16, 32>}, {transform_indices = @transform_4, window_bounds = array<i64: 1, 16, 32>}, {transform_indices = @transform_5, window_bounds = array<i64: 1, 16, 32>}, {transform_indices = @transform_6, window_bounds = array<i64: 1, 16, 32>}, {transform_indices = @transform_7, window_bounds = array<i64: 1, 16, 32>}, {transform_indices = @transform_8, window_bounds = array<i64: 1, 16, 32>}, {pipeline_mode = #tpu.pipeline_mode<synchronous>, transform_indices = @transform_9, window_bounds = array<i64: 32, 128>}, {pipeline_mode = #tpu.pipeline_mode<synchronous>, transform_indices = @transform_10, window_bounds = array<i64: 3, 128>}, {pipeline_mode = #tpu.pipeline_mode<synchronous>, transform_indices = @transform_11, window_bounds = array<i64: 1, 128>}, {pipeline_mode = #tpu.pipeline_mode<synchronous>, transform_indices = @transform_12, window_bounds = array<i64: 1, 128>}, {pipeline_mode = #tpu.pipeline_mode<synchronous>, transform_indices = @transform_13, window_bounds = array<i64: 1, 128>}, {pipeline_mode = #tpu.pipeline_mode<synchronous>, transform_indices = @transform_14, window_bounds = array<i64: 128, 7>}, {pipeline_mode = #tpu.pipeline_mode<synchronous>, transform_indices = @transform_15, window_bounds = array<i64: 1, 7>}, {pipeline_mode = #tpu.pipeline_mode<synchronous>, transform_indices = @transform_16, window_bounds = array<i64: 1, 7>}, {pipeline_mode = #tpu.pipeline_mode<synchronous>, transform_indices = @transform_17, window_bounds = array<i64: 1, 7>}, {pipeline_mode = #tpu.pipeline_mode<synchronous>, transform_indices = @transform_18, window_bounds = array<i64: 32, 64>}, {pipeline_mode = #tpu.pipeline_mode<synchronous>, transform_indices = @transform_19, window_bounds = array<i64: 1, 64>}, {transform_indices = @transform_20, window_bounds = array<i64: 1, 16, 32>}, {transform_indices = @transform_21, window_bounds = array<i64: 1, 7, 16>}, {transform_indices = @transform_22, window_bounds = array<i64: 1, 16, 64>}]} {
    %c0 = arith.constant 0 : index
    %c0_0 = arith.constant 0 : index
    %c0_1 = arith.constant 0 : index
    %0 = vector.load %arg2[%c0, %c0_0, %c0_1] : memref<1x16x32xf32, #tpu.memory_space<vmem>>, vector<1x16x32xf32>
    %1 = vector.shape_cast %0 : vector<1x16x32xf32> to vector<16x32xf32>
    %2 = arith.truncf %1 : vector<16x32xf32> to vector<16x32xbf16>
    %c0_2 = arith.constant 0 : index
    %c0_3 = arith.constant 0 : index
    %c0_4 = arith.constant 0 : index
    %3 = vector.load %arg3[%c0_2, %c0_3, %c0_4] : memref<1x16x3xf32, #tpu.memory_space<vmem>>, vector<1x16x3xf32>
    %4 = vector.shape_cast %3 : vector<1x16x3xf32> to vector<16x3xf32>
    %5 = arith.truncf %4 : vector<16x3xf32> to vector<16x3xbf16>
    %c0_5 = arith.constant 0 : index
    %c0_6 = arith.constant 0 : index
    %6 = vector.load %arg11[%c0_5, %c0_6] : memref<32x128xbf16, #tpu.memory_space<vmem>>, vector<32x128xbf16>
    %cst = arith.constant dense<0.000000e+00> : vector<16x128xf32>
    %7 = tpu.matmul %2, %6, %cst {dimension_numbers = #tpu.dot_dimension_numbers<[1], [0], [0], [1], [0, 0, 1, 1], [], []>} : vector<16x32xbf16>, vector<32x128xbf16>, vector<16x128xf32> -> vector<16x128xf32>
    %c0_7 = arith.constant 0 : index
    %c0_8 = arith.constant 0 : index
    %8 = vector.load %arg12[%c0_7, %c0_8] : memref<3x128xbf16, #tpu.memory_space<vmem>>, vector<3x128xbf16>
    %cst_9 = arith.constant dense<0.000000e+00> : vector<16x128xf32>
    %9 = tpu.matmul %5, %8, %cst_9 {dimension_numbers = #tpu.dot_dimension_numbers<[1], [0], [0], [1], [0, 0, 1, 1], [], []>} : vector<16x3xbf16>, vector<3x128xbf16>, vector<16x128xf32> -> vector<16x128xf32>
    %10 = arith.addf %7, %9 : vector<16x128xf32>
    %c0_10 = arith.constant 0 : index
    %c0_11 = arith.constant 0 : index
    %11 = vector.load %arg13[%c0_10, %c0_11] : memref<1x128xf32, #tpu.memory_space<vmem>>, vector<1x128xf32>
    %12 = vector.broadcast %11 : vector<1x128xf32> to vector<16x128xf32>
    %13 = arith.addf %10, %12 : vector<16x128xf32>
    %c0_12 = arith.constant 0 : index
    %c0_13 = arith.constant 0 : index
    %14 = vector.load %arg14[%c0_12, %c0_13] : memref<1x128xf32, #tpu.memory_space<vmem>>, vector<1x128xf32>
    %c0_14 = arith.constant 0 : index
    %c0_15 = arith.constant 0 : index
    %15 = vector.load %arg15[%c0_14, %c0_15] : memref<1x128xf32, #tpu.memory_space<vmem>>, vector<1x128xf32>
    %16 = tpu.iota {dimensions = array<i32: 1>} : vector<1x128xi32>
    %c17_i32 = arith.constant 17 : i32
    %17 = vector.broadcast %c17_i32 : i32 to vector<1x128xi32>
    %18 = arith.cmpi slt, %16, %17 : vector<1x128xi32>
    %19 = arith.extui %18 : vector<1x128xi1> to vector<1x128xi32>
    %20 = arith.sitofp %19 : vector<1x128xi32> to vector<1x128xf32>
    %21 = vector.broadcast %20 : vector<1x128xf32> to vector<16x128xf32>
    %22 = arith.mulf %13, %21 : vector<16x128xf32>
    %cst_16 = arith.constant dense<0.000000e+00> : vector<16xf32>
    %23 = vector.multi_reduction <add>, %22, %cst_16 [1] : vector<16x128xf32> to vector<16xf32>
    %24 = vector.shape_cast %23 : vector<16xf32> to vector<16x1xf32>
    %cst_17 = arith.constant 1.700000e+01 : f32
    %25 = vector.broadcast %cst_17 : f32 to vector<16x1xf32>
    %26 = arith.divf %24, %25 : vector<16x1xf32>
    %27 = vector.broadcast %26 : vector<16x1xf32> to vector<16x128xf32>
    %28 = arith.subf %13, %27 : vector<16x128xf32>
    %29 = vector.broadcast %20 : vector<1x128xf32> to vector<16x128xf32>
    %30 = arith.mulf %28, %29 : vector<16x128xf32>
    %31 = arith.mulf %30, %30 : vector<16x128xf32>
    %cst_18 = arith.constant dense<0.000000e+00> : vector<16xf32>
    %32 = vector.multi_reduction <add>, %31, %cst_18 [1] : vector<16x128xf32> to vector<16xf32>
    %33 = vector.shape_cast %32 : vector<16xf32> to vector<16x1xf32>
    %cst_19 = arith.constant 1.700000e+01 : f32
    %34 = vector.broadcast %cst_19 : f32 to vector<16x1xf32>
    %35 = arith.divf %33, %34 : vector<16x1xf32>
    %cst_20 = arith.constant 9.99999974E-6 : f32
    %36 = vector.broadcast %cst_20 : f32 to vector<16x1xf32>
    %37 = arith.addf %35, %36 : vector<16x1xf32>
    %38 = math.rsqrt %37 : vector<16x1xf32>
    %39 = vector.broadcast %38 : vector<16x1xf32> to vector<16x128xf32>
    %40 = arith.mulf %30, %39 : vector<16x128xf32>
    %41 = vector.broadcast %14 : vector<1x128xf32> to vector<16x128xf32>
    %42 = arith.mulf %40, %41 : vector<16x128xf32>
    %43 = vector.broadcast %15 : vector<1x128xf32> to vector<16x128xf32>
    %44 = arith.addf %42, %43 : vector<16x128xf32>
    %cst_21 = arith.constant 5.000000e-01 : f32
    %45 = vector.broadcast %cst_21 : f32 to vector<16x128xf32>
    %46 = arith.mulf %45, %44 : vector<16x128xf32>
    %cst_22 = arith.constant 0.707106769 : f32
    %47 = vector.broadcast %cst_22 : f32 to vector<16x128xf32>
    %48 = arith.mulf %44, %47 : vector<16x128xf32>
    %49 = math.erf %48 : vector<16x128xf32>
    %cst_23 = arith.constant 1.000000e+00 : f32
    %50 = vector.broadcast %cst_23 : f32 to vector<16x128xf32>
    %51 = arith.addf %50, %49 : vector<16x128xf32>
    %52 = arith.mulf %46, %51 : vector<16x128xf32>
    %53 = arith.truncf %52 : vector<16x128xf32> to vector<16x128xbf16>
    %c0_24 = arith.constant 0 : index
    %c0_25 = arith.constant 0 : index
    %54 = vector.load %arg16[%c0_24, %c0_25] : memref<128x7xbf16, #tpu.memory_space<vmem>>, vector<128x7xbf16>
    %cst_26 = arith.constant dense<0.000000e+00> : vector<16x7xf32>
    %55 = tpu.matmul %53, %54, %cst_26 {dimension_numbers = #tpu.dot_dimension_numbers<[1], [0], [0], [1], [0, 0, 1, 1], [], []>} : vector<16x128xbf16>, vector<128x7xbf16>, vector<16x7xf32> -> vector<16x7xf32>
    %c0_27 = arith.constant 0 : index
    %c0_28 = arith.constant 0 : index
    %56 = vector.load %arg17[%c0_27, %c0_28] : memref<1x7xf32, #tpu.memory_space<vmem>>, vector<1x7xf32>
    %57 = vector.broadcast %56 : vector<1x7xf32> to vector<16x7xf32>
    %58 = arith.addf %55, %57 : vector<16x7xf32>
    %c0_29 = arith.constant 0 : index
    %c0_30 = arith.constant 0 : index
    %59 = vector.load %arg18[%c0_29, %c0_30] : memref<1x7xf32, #tpu.memory_space<vmem>>, vector<1x7xf32>
    %c0_31 = arith.constant 0 : index
    %c0_32 = arith.constant 0 : index
    %60 = vector.load %arg19[%c0_31, %c0_32] : memref<1x7xf32, #tpu.memory_space<vmem>>, vector<1x7xf32>
    %cst_33 = arith.constant dense<0.000000e+00> : vector<16xf32>
    %61 = vector.multi_reduction <add>, %58, %cst_33 [1] : vector<16x7xf32> to vector<16xf32>
    %62 = vector.shape_cast %61 : vector<16xf32> to vector<16x1xf32>
    %cst_34 = arith.constant 7.000000e+00 : f32
    %63 = vector.broadcast %cst_34 : f32 to vector<16x1xf32>
    %64 = arith.divf %62, %63 : vector<16x1xf32>
    %65 = vector.broadcast %64 : vector<16x1xf32> to vector<16x7xf32>
    %66 = arith.subf %58, %65 : vector<16x7xf32>
    %67 = arith.mulf %66, %66 : vector<16x7xf32>
    %cst_35 = arith.constant dense<0.000000e+00> : vector<16xf32>
    %68 = vector.multi_reduction <add>, %67, %cst_35 [1] : vector<16x7xf32> to vector<16xf32>
    %69 = vector.shape_cast %68 : vector<16xf32> to vector<16x1xf32>
    %cst_36 = arith.constant 7.000000e+00 : f32
    %70 = vector.broadcast %cst_36 : f32 to vector<16x1xf32>
    %71 = arith.divf %69, %70 : vector<16x1xf32>
    %cst_37 = arith.constant 9.99999974E-6 : f32
    %72 = vector.broadcast %cst_37 : f32 to vector<16x1xf32>
    %73 = arith.addf %71, %72 : vector<16x1xf32>
    %74 = math.rsqrt %73 : vector<16x1xf32>
    %75 = vector.broadcast %74 : vector<16x1xf32> to vector<16x7xf32>
    %76 = arith.mulf %66, %75 : vector<16x7xf32>
    %77 = vector.broadcast %59 : vector<1x7xf32> to vector<16x7xf32>
    %78 = arith.mulf %76, %77 : vector<16x7xf32>
    %79 = vector.broadcast %60 : vector<1x7xf32> to vector<16x7xf32>
    %80 = arith.addf %78, %79 : vector<16x7xf32>
    %cst_38 = arith.constant dense<0xFF800000> : vector<16xf32>
    %81 = vector.multi_reduction <maximumf>, %80, %cst_38 [1] : vector<16x7xf32> to vector<16xf32>
    %82 = vector.shape_cast %81 : vector<16xf32> to vector<16x1xf32>
    %83 = vector.broadcast %82 : vector<16x1xf32> to vector<16x7xf32>
    %84 = arith.subf %80, %83 : vector<16x7xf32>
    %85 = math.exp %84 : vector<16x7xf32>
    %cst_39 = arith.constant dense<0.000000e+00> : vector<16xf32>
    %86 = vector.multi_reduction <add>, %85, %cst_39 [1] : vector<16x7xf32> to vector<16xf32>
    %87 = vector.shape_cast %86 : vector<16xf32> to vector<16x1xf32>
    %88 = vector.broadcast %87 : vector<16x1xf32> to vector<16x7xf32>
    %89 = arith.divf %85, %88 : vector<16x7xf32>
    %90 = tpu.transpose %89, [1, 0] : vector<16x7xf32> -> vector<7x16xf32>
    %c0_40 = arith.constant 0 : index
    %c0_41 = arith.constant 0 : index
    %c0_42 = arith.constant 0 : index
    %91 = vector.load %arg23[%c0_40, %c0_41, %c0_42] : memref<1x7x16xf32, #tpu.memory_space<vmem>>, vector<1x7x16xf32>
    %92 = vector.shape_cast %91 : vector<1x7x16xf32> to vector<7x16xf32>
    %93 = vector.shape_cast %90 : vector<7x16xf32> to vector<1x7x16xf32>
    tpu.vector_store %arg23[%c0_40, %c0_41, %c0_42], %93 {strides = array<i32>} : memref<1x7x16xf32, #tpu.memory_space<vmem>>, vector<1x7x16xf32>,
    %c0_43 = arith.constant 0 : index
    %c0_44 = arith.constant 0 : index
    %c0_45 = arith.constant 0 : index
    %94 = vector.load %arg4[%c0_43, %c0_44, %c0_45] : memref<1x16x32xf32, #tpu.memory_space<vmem>>, vector<1x16x32xf32>
    %95 = vector.shape_cast %94 : vector<1x16x32xf32> to vector<16x32xf32>
    %96 = vector.extract_strided_slice %89 {offsets = [0, 0], sizes = [16, 1], strides = [1, 1]} : vector<16x7xf32> to vector<16x1xf32>
    %97 = vector.broadcast %96 : vector<16x1xf32> to vector<16x32xf32>
    %98 = arith.mulf %95, %97 : vector<16x32xf32>
    %c0_46 = arith.constant 0 : index
    %c0_47 = arith.constant 0 : index
    %c0_48 = arith.constant 0 : index
    %99 = vector.load %arg5[%c0_46, %c0_47, %c0_48] : memref<1x16x32xf32, #tpu.memory_space<vmem>>, vector<1x16x32xf32>
    %100 = vector.shape_cast %99 : vector<1x16x32xf32> to vector<16x32xf32>
    %101 = vector.extract_strided_slice %89 {offsets = [0, 1], sizes = [16, 1], strides = [1, 1]} : vector<16x7xf32> to vector<16x1xf32>
    %102 = vector.broadcast %101 : vector<16x1xf32> to vector<16x32xf32>
    %103 = arith.mulf %100, %102 : vector<16x32xf32>
    %104 = arith.addf %98, %103 : vector<16x32xf32>
    %c0_49 = arith.constant 0 : index
    %c0_50 = arith.constant 0 : index
    %c0_51 = arith.constant 0 : index
    %105 = vector.load %arg6[%c0_49, %c0_50, %c0_51] : memref<1x16x32xf32, #tpu.memory_space<vmem>>, vector<1x16x32xf32>
    %106 = vector.shape_cast %105 : vector<1x16x32xf32> to vector<16x32xf32>
    %107 = vector.extract_strided_slice %89 {offsets = [0, 2], sizes = [16, 1], strides = [1, 1]} : vector<16x7xf32> to vector<16x1xf32>
    %108 = vector.broadcast %107 : vector<16x1xf32> to vector<16x32xf32>
    %109 = arith.mulf %106, %108 : vector<16x32xf32>
    %110 = arith.addf %104, %109 : vector<16x32xf32>
    %c0_52 = arith.constant 0 : index
    %c0_53 = arith.constant 0 : index
    %c0_54 = arith.constant 0 : index
    %111 = vector.load %arg7[%c0_52, %c0_53, %c0_54] : memref<1x16x32xf32, #tpu.memory_space<vmem>>, vector<1x16x32xf32>
    %112 = vector.shape_cast %111 : vector<1x16x32xf32> to vector<16x32xf32>
    %113 = vector.extract_strided_slice %89 {offsets = [0, 3], sizes = [16, 1], strides = [1, 1]} : vector<16x7xf32> to vector<16x1xf32>
    %114 = vector.broadcast %113 : vector<16x1xf32> to vector<16x32xf32>
    %115 = arith.mulf %112, %114 : vector<16x32xf32>
    %116 = arith.addf %110, %115 : vector<16x32xf32>
    %c0_55 = arith.constant 0 : index
    %c0_56 = arith.constant 0 : index
    %c0_57 = arith.constant 0 : index
    %117 = vector.load %arg8[%c0_55, %c0_56, %c0_57] : memref<1x16x32xf32, #tpu.memory_space<vmem>>, vector<1x16x32xf32>
    %118 = vector.shape_cast %117 : vector<1x16x32xf32> to vector<16x32xf32>
    %119 = vector.extract_strided_slice %89 {offsets = [0, 4], sizes = [16, 1], strides = [1, 1]} : vector<16x7xf32> to vector<16x1xf32>
    %120 = vector.broadcast %119 : vector<16x1xf32> to vector<16x32xf32>
    %121 = arith.mulf %118, %120 : vector<16x32xf32>
    %122 = arith.addf %116, %121 : vector<16x32xf32>
    %c0_58 = arith.constant 0 : index
    %c0_59 = arith.constant 0 : index
    %c0_60 = arith.constant 0 : index
    %123 = vector.load %arg9[%c0_58, %c0_59, %c0_60] : memref<1x16x32xf32, #tpu.memory_space<vmem>>, vector<1x16x32xf32>
    %124 = vector.shape_cast %123 : vector<1x16x32xf32> to vector<16x32xf32>
    %125 = vector.extract_strided_slice %89 {offsets = [0, 5], sizes = [16, 1], strides = [1, 1]} : vector<16x7xf32> to vector<16x1xf32>
    %126 = vector.broadcast %125 : vector<16x1xf32> to vector<16x32xf32>
    %127 = arith.mulf %124, %126 : vector<16x32xf32>
    %128 = arith.addf %122, %127 : vector<16x32xf32>
    %c0_61 = arith.constant 0 : index
    %c0_62 = arith.constant 0 : index
    %c0_63 = arith.constant 0 : index
    %129 = vector.load %arg10[%c0_61, %c0_62, %c0_63] : memref<1x16x32xf32, #tpu.memory_space<vmem>>, vector<1x16x32xf32>
    %130 = vector.shape_cast %129 : vector<1x16x32xf32> to vector<16x32xf32>
    %131 = vector.extract_strided_slice %89 {offsets = [0, 6], sizes = [16, 1], strides = [1, 1]} : vector<16x7xf32> to vector<16x1xf32>
    %132 = vector.broadcast %131 : vector<16x1xf32> to vector<16x32xf32>
    %133 = arith.mulf %130, %132 : vector<16x32xf32>
    %134 = arith.addf %128, %133 : vector<16x32xf32>
    %c0_64 = arith.constant 0 : index
    %c0_65 = arith.constant 0 : index
    %c0_66 = arith.constant 0 : index
    %135 = vector.load %arg22[%c0_64, %c0_65, %c0_66] : memref<1x16x32xf32, #tpu.memory_space<vmem>>, vector<1x16x32xf32>
    %136 = vector.shape_cast %135 : vector<1x16x32xf32> to vector<16x32xf32>
    %137 = vector.shape_cast %134 : vector<16x32xf32> to vector<1x16x32xf32>
    tpu.vector_store %arg22[%c0_64, %c0_65, %c0_66], %137 {strides = array<i32>} : memref<1x16x32xf32, #tpu.memory_space<vmem>>, vector<1x16x32xf32>,
    %138 = arith.truncf %134 : vector<16x32xf32> to vector<16x32xbf16>
    %c0_67 = arith.constant 0 : index
    %c0_68 = arith.constant 0 : index
    %139 = vector.load %arg20[%c0_67, %c0_68] : memref<32x64xbf16, #tpu.memory_space<vmem>>, vector<32x64xbf16>
    %cst_69 = arith.constant dense<0.000000e+00> : vector<16x64xf32>
    %140 = tpu.matmul %138, %139, %cst_69 {dimension_numbers = #tpu.dot_dimension_numbers<[1], [0], [0], [1], [0, 0, 1, 1], [], []>} : vector<16x32xbf16>, vector<32x64xbf16>, vector<16x64xf32> -> vector<16x64xf32>
    %c0_70 = arith.constant 0 : index
    %c0_71 = arith.constant 0 : index
    %141 = vector.load %arg21[%c0_70, %c0_71] : memref<1x64xf32, #tpu.memory_space<vmem>>, vector<1x64xf32>
    %142 = vector.broadcast %141 : vector<1x64xf32> to vector<16x64xf32>
    %143 = arith.addf %140, %142 : vector<16x64xf32>
    %144 = arith.truncf %143 : vector<16x64xf32> to vector<16x64xbf16>
    %c0_72 = arith.constant 0 : index
    %c0_73 = arith.constant 0 : index
    %c0_74 = arith.constant 0 : index
    %145 = vector.load %arg24[%c0_72, %c0_73, %c0_74] : memref<1x16x64xbf16, #tpu.memory_space<vmem>>, vector<1x16x64xbf16>
    %146 = vector.shape_cast %145 : vector<1x16x64xbf16> to vector<16x64xbf16>
    %147 = vector.shape_cast %144 : vector<16x64xbf16> to vector<1x16x64xbf16>
    tpu.vector_store %arg24[%c0_72, %c0_73, %c0_74], %147 {strides = array<i32>} : memref<1x16x64xbf16, #tpu.memory_space<vmem>>, vector<1x16x64xbf16>,
    return
  }
  func.func @transform_0(%arg0: i32, %arg1: i32) -> (i32, i32, i32) {
    %c0_i32 = arith.constant 0 : i32
    %c0_i32_0 = arith.constant 0 : i32
    return %arg0, %arg1, %c0_i32 : i32, i32, i32
  }
  func.func @transform_1(%arg0: i32, %arg1: i32) -> (i32, i32, i32) {
    %c0_i32 = arith.constant 0 : i32
    %c0_i32_0 = arith.constant 0 : i32
    return %arg0, %arg1, %c0_i32 : i32, i32, i32
  }
  func.func @transform_2(%arg0: i32, %arg1: i32) -> (i32, i32, i32) {
    %c0_i32 = arith.constant 0 : i32
    %c0_i32_0 = arith.constant 0 : i32
    return %arg0, %arg1, %c0_i32 : i32, i32, i32
  }
  func.func @transform_3(%arg0: i32, %arg1: i32) -> (i32, i32, i32) {
    %c0_i32 = arith.constant 0 : i32
    %c0_i32_0 = arith.constant 0 : i32
    return %arg0, %arg1, %c0_i32 : i32, i32, i32
  }
  func.func @transform_4(%arg0: i32, %arg1: i32) -> (i32, i32, i32) {
    %c0_i32 = arith.constant 0 : i32
    %c0_i32_0 = arith.constant 0 : i32
    return %arg0, %arg1, %c0_i32 : i32, i32, i32
  }
  func.func @transform_5(%arg0: i32, %arg1: i32) -> (i32, i32, i32) {
    %c0_i32 = arith.constant 0 : i32
    %c0_i32_0 = arith.constant 0 : i32
    return %arg0, %arg1, %c0_i32 : i32, i32, i32
  }
  func.func @transform_6(%arg0: i32, %arg1: i32) -> (i32, i32, i32) {
    %c0_i32 = arith.constant 0 : i32
    %c0_i32_0 = arith.constant 0 : i32
    return %arg0, %arg1, %c0_i32 : i32, i32, i32
  }
  func.func @transform_7(%arg0: i32, %arg1: i32) -> (i32, i32, i32) {
    %c0_i32 = arith.constant 0 : i32
    %c0_i32_0 = arith.constant 0 : i32
    return %arg0, %arg1, %c0_i32 : i32, i32, i32
  }
  func.func @transform_8(%arg0: i32, %arg1: i32) -> (i32, i32, i32) {
    %c0_i32 = arith.constant 0 : i32
    %c0_i32_0 = arith.constant 0 : i32
    return %arg0, %arg1, %c0_i32 : i32, i32, i32
  }
  func.func @transform_9(%arg0: i32, %arg1: i32) -> (i32, i32) {
    %c0_i32 = arith.constant 0 : i32
    %c0_i32_0 = arith.constant 0 : i32
    %c0_i32_1 = arith.constant 0 : i32
    return %c0_i32, %c0_i32_0 : i32, i32
  }
  func.func @transform_10(%arg0: i32, %arg1: i32) -> (i32, i32) {
    %c0_i32 = arith.constant 0 : i32
    %c0_i32_0 = arith.constant 0 : i32
    %c0_i32_1 = arith.constant 0 : i32
    return %c0_i32, %c0_i32_0 : i32, i32
  }
  func.func @transform_11(%arg0: i32, %arg1: i32) -> (i32, i32) {
    %c0_i32 = arith.constant 0 : i32
    %c0_i32_0 = arith.constant 0 : i32
    %c0_i32_1 = arith.constant 0 : i32
    return %c0_i32, %c0_i32_0 : i32, i32
  }
  func.func @transform_12(%arg0: i32, %arg1: i32) -> (i32, i32) {
    %c0_i32 = arith.constant 0 : i32
    %c0_i32_0 = arith.constant 0 : i32
    %c0_i32_1 = arith.constant 0 : i32
    return %c0_i32, %c0_i32_0 : i32, i32
  }
  func.func @transform_13(%arg0: i32, %arg1: i32) -> (i32, i32) {
    %c0_i32 = arith.constant 0 : i32
    %c0_i32_0 = arith.constant 0 : i32
    %c0_i32_1 = arith.constant 0 : i32
    return %c0_i32, %c0_i32_0 : i32, i32
  }
  func.func @transform_14(%arg0: i32, %arg1: i32) -> (i32, i32) {
    %c0_i32 = arith.constant 0 : i32
    %c0_i32_0 = arith.constant 0 : i32
    %c0_i32_1 = arith.constant 0 : i32
    return %c0_i32, %c0_i32_0 : i32, i32
  }
  func.func @transform_15(%arg0: i32, %arg1: i32) -> (i32, i32) {
    %c0_i32 = arith.constant 0 : i32
    %c0_i32_0 = arith.constant 0 : i32
    %c0_i32_1 = arith.constant 0 : i32
    return %c0_i32, %c0_i32_0 : i32, i32
  }
  func.func @transform_16(%arg0: i32, %arg1: i32) -> (i32, i32) {
    %c0_i32 = arith.constant 0 : i32
    %c0_i32_0 = arith.constant 0 : i32
    %c0_i32_1 = arith.constant 0 : i32
    return %c0_i32, %c0_i32_0 : i32, i32
  }
  func.func @transform_17(%arg0: i32, %arg1: i32) -> (i32, i32) {
    %c0_i32 = arith.constant 0 : i32
    %c0_i32_0 = arith.constant 0 : i32
    %c0_i32_1 = arith.constant 0 : i32
    return %c0_i32, %c0_i32_0 : i32, i32
  }
  func.func @transform_18(%arg0: i32, %arg1: i32) -> (i32, i32) {
    %c0_i32 = arith.constant 0 : i32
    %c0_i32_0 = arith.constant 0 : i32
    %c0_i32_1 = arith.constant 0 : i32
    return %c0_i32, %c0_i32_0 : i32, i32
  }
  func.func @transform_19(%arg0: i32, %arg1: i32) -> (i32, i32) {
    %c0_i32 = arith.constant 0 : i32
    %c0_i32_0 = arith.constant 0 : i32
    %c0_i32_1 = arith.constant 0 : i32
    return %c0_i32, %c0_i32_0 : i32, i32
  }
  func.func @transform_20(%arg0: i32, %arg1: i32) -> (i32, i32, i32) {
    %c0_i32 = arith.constant 0 : i32
    %c0_i32_0 = arith.constant 0 : i32
    return %arg0, %arg1, %c0_i32 : i32, i32, i32
  }
  func.func @transform_21(%arg0: i32, %arg1: i32) -> (i32, i32, i32) {
    %c0_i32 = arith.constant 0 : i32
    %c0_i32_0 = arith.constant 0 : i32
    return %arg0, %c0_i32, %arg1 : i32, i32, i32
  }
  func.func @transform_22(%arg0: i32, %arg1: i32) -> (i32, i32, i32) {
    %c0_i32 = arith.constant 0 : i32
    %c0_i32_0 = arith.constant 0 : i32
    return %arg0, %arg1, %c0_i32 : i32, i32, i32
  }
}

</mosaic_0001>

<llo_original>
// kernel: tpu_custom_call.1
$region0: #{tpu_custom_call.1}
  #allocation0 [shape = 'u32[]', space=smem, size = 0x4, offset = 0x4, fixed_abs, tag = 'smem constant byte address 0x4 - core index']
  #allocation1 [shape = 'u32[144,128]{1,0:T(1,128)}', space=vmem, size = 0x12000, scoped, tag = 'internal scratch']
  %s0 = inlined_call_operand.vmem [shape: f32[2,16,32], index: 0, kind: input, shape index: {}]
  %s1 = inlined_call_operand.vmem [shape: f32[2,16,3], index: 1, kind: input, shape index: {}]
  %s2 = inlined_call_operand.vmem [shape: f32[2,16,32], index: 2, kind: input, shape index: {}]
  %s3 = inlined_call_operand.vmem [shape: f32[2,16,32], index: 3, kind: input, shape index: {}]
  %s4 = inlined_call_operand.hbm [shape: f32[2,16,32], index: 4, kind: input, shape index: {}]
  %s5 = inlined_call_operand.hbm [shape: f32[2,16,32], index: 5, kind: input, shape index: {}]
  %s6 = inlined_call_operand.hbm [shape: f32[2,16,32], index: 6, kind: input, shape index: {}]
  %s7 = inlined_call_operand.hbm [shape: f32[2,16,32], index: 7, kind: input, shape index: {}]
  %s8 = inlined_call_operand.hbm [shape: f32[2,16,32], index: 8, kind: input, shape index: {}]
  %s9 = inlined_call_operand.vmem [shape: bf16[32,128], index: 9, kind: input, shape index: {}]
  %s10 = inlined_call_operand.hbm [shape: bf16[3,128], index: 10, kind: input, shape index: {}]
  %s11 = inlined_call_operand.vmem [shape: f32[1,128], index: 11, kind: input, shape index: {}]
  %s12 = inlined_call_operand.hbm [shape: f32[1,128], index: 12, kind: input, shape index: {}]
  %s13 = inlined_call_operand.hbm [shape: f32[1,128], index: 13, kind: input, shape index: {}]
  %s14 = inlined_call_operand.vmem [shape: bf16[128,7], index: 14, kind: input, shape index: {}]
  %s15 = inlined_call_operand.vmem [shape: f32[1,7], index: 15, kind: input, shape index: {}]
  %s16 = inlined_call_operand.vmem [shape: f32[1,7], index: 16, kind: input, shape index: {}]
  %s17 = inlined_call_operand.vmem [shape: f32[1,7], index: 17, kind: input, shape index: {}]
  %s18 = inlined_call_operand.vmem [shape: bf16[32,64], index: 18, kind: input, shape index: {}]
  %s19 = inlined_call_operand.vmem [shape: f32[1,64], index: 19, kind: input, shape index: {}]
  %s20 = inlined_call_operand.hbm [shape: f32[2,16,32], index: 20, kind: output, shape index: {0}]
  %s21 = inlined_call_operand.vmem [shape: f32[2,7,16], index: 21, kind: output, shape index: {1}]
  %s22 = inlined_call_operand.hbm [shape: bf16[2,16,64], index: 22, kind: output, shape index: {2}]
  %23 = xla_tuple %s20, %s21, %s22
  %s24 = sld [smem:[#allocation0]]
  $region161: #{tpu_custom_call.1} parent=0
    _
  %s26 = ssub.s32 1, %s24
  %s27 = scalar_select 0, %s26, %s24
  $region1: #{tpu_custom_call.1} parent=0
    #allocation2 [shape = 'u8[16384]{0}', space=vmem, size = 0x4000, scoped, tag = 'input window, operand 4']
    #allocation3 [shape = 's32[2]{0}', space=sflag, size = 0x8, scoped, tag = 'scoped memory for tpu_custom_call.1']
    #allocation4 [shape = 's32[2]{0}', space=sflag, size = 0x8, scoped, tag = 'scoped memory for tpu_custom_call.1']
    #allocation5 [shape = 'u8[16384]{0}', space=vmem, size = 0x4000, scoped, tag = 'input window, operand 5']
    #allocation6 [shape = 's32[2]{0}', space=sflag, size = 0x8, scoped, tag = 'scoped memory for tpu_custom_call.1']
    #allocation7 [shape = 'u8[16384]{0}', space=vmem, size = 0x4000, scoped, tag = 'input window, operand 6']
    #allocation8 [shape = 'u8[16384]{0}', space=vmem, size = 0x4000, scoped, tag = 'input window, operand 7']
    #allocation9 [shape = 's32[2]{0}', space=sflag, size = 0x8, scoped, tag = 'scoped memory for tpu_custom_call.1']
    #allocation10 [shape = 'u8[16384]{0}', space=vmem, size = 0x4000, scoped, tag = 'input window, operand 8']
    #allocation11 [shape = 'u8[1024]{0}', space=vmem, size = 0x400, scoped, tag = 'input window, operand 10, single buffered']
    #allocation12 [shape = 's32[1]{0}', space=sflag, size = 0x4, scoped, tag = 'scoped memory for tpu_custom_call.1']
    #allocation13 [shape = 'u8[512]{0}', space=vmem, size = 0x400, scoped, tag = 'input window, operand 12, single buffered']
    #allocation14 [shape = 'u8[512]{0}', space=vmem, size = 0x400, scoped, tag = 'input window, operand 13, single buffered']
    #allocation15 [shape = 's32[1]{0}', space=sflag, size = 0x4, scoped, tag = 'scoped memory for tpu_custom_call.1']
    #allocation16 [shape = 'u8[16384]{0}', space=vmem, size = 0x4000, scoped, tag = 'output window, operand 0']
    #allocation17 [shape = 'u8[8192]{0}', space=vmem, size = 0x2000, scoped, tag = 'output window, operand 2']
    #allocation18 [shape = 's32[2]{0}', space=sflag, size = 0x8, scoped, tag = 'scoped memory for tpu_custom_call.1']
    %28 = vsyncpa [#allocation3], 0
    %s29 = scalar_lea.sflag [#allocation3], 1
    %30 = vsyncpa %s29, 0
    %31 = vsyncpa [#allocation6], 0
    %s32 = scalar_lea.sflag [#allocation6], 1
    %33 = vsyncpa %s32, 0
    %34 = vsyncpa [#allocation9], 0
    %s35 = scalar_lea.sflag [#allocation9], 1
    %36 = vsyncpa %s35, 0
    %37 = vsyncpa [#allocation12], 0
    %38 = vsyncpa [#allocation15], 0
    %39 = vsyncpa [#allocation4], 0
    %s40 = scalar_lea.sflag [#allocation4], 1
    %41 = vsyncpa %s40, 0
    %42 = vsyncpa [#allocation18], 0
    %s43 = scalar_lea.sflag [#allocation18], 1
    %44 = vsyncpa %s43, 0
    loop: start=0, step=1, limit=4
    $region2: #{tpu_custom_call.1} parent=1 // loop_pre_header
      _
    $region3: #{tpu_custom_call.1} parent=1 // loop_header
      %s46 = sphi 0, %s50
      %p47 = scmp.ge.s32.totalorder %s46, 4
      %s53 = sphi 0, %s65
      %s54 = sphi 0, %s61
      %s55 = sphi 0, %s53
      %s56 = sphi 0, %s54
      %s57 = sphi 0, %s55
      %s58 = sphi 0, %s56
      %s70 = sphi 0, %s72
      %s73 = sphi 0, %s70
      %s74 = sphi 0, %s73
      %s90 = sphi 0, %s74
      %s98 = sphi 0, %s100
      %s101 = sphi 0, %s98
      %s102 = sphi 0, %s101
      %s118 = sphi 0, %s102
      %s126 = sphi 0, %s128
      %s129 = sphi 0, %s126
      %s130 = sphi 0, %s129
      %s146 = sphi 0, %s130
      %s154 = sphi 0, %s156
      %s157 = sphi 0, %s154
      %s158 = sphi 0, %s157
      %s174 = sphi 0, %s158
      %s182 = sphi 0, %s184
      %s185 = sphi 0, %s182
      %s186 = sphi 0, %s185
      %s202 = sphi 0, %s186
      %s210 = sphi 0, %s212
      %s213 = sphi 0, %s210
      %s214 = sphi 0, %s213
      %s230 = sphi 0, %s214
      %s238 = sphi 0, %s240
      %s241 = sphi 0, %s238
      %s242 = sphi 0, %s241
      %s258 = sphi 0, %s242
      %s266 = sphi 0, %s268
      %s269 = sphi 0, %s266
      %s270 = sphi 0, %s269
      %s286 = sphi 0, %s270
      %s294 = sphi 0, %s296
      %s297 = sphi 0, %s294
      %s298 = sphi 0, %s297
      %s314 = sphi 0, %s298
      %s318 = sphi 0, %s318
      %s320 = sphi 0, %s318
      %s321 = sphi 0, %s320
      %s335 = sphi 0, %s321
      %s339 = sphi 0, %s339
      %s341 = sphi 0, %s339
      %s342 = sphi 0, %s341
      %s356 = sphi 0, %s342
      %s360 = sphi 0, %s360
      %s362 = sphi 0, %s360
      %s363 = sphi 0, %s362
      %s377 = sphi 0, %s363
      %s381 = sphi 0, %s381
      %s383 = sphi 0, %s381
      %s384 = sphi 0, %s383
      %s398 = sphi 0, %s384
      %s402 = sphi 0, %s402
      %s404 = sphi 0, %s402
      %s405 = sphi 0, %s404
      %s419 = sphi 0, %s405
      %s423 = sphi 0, %s423
      %s425 = sphi 0, %s423
      %s426 = sphi 0, %s425
      %s440 = sphi 0, %s426
      %s444 = sphi 0, %s444
      %s446 = sphi 0, %s444
      %s447 = sphi 0, %s446
      %s461 = sphi 0, %s447
      %s465 = sphi 0, %s465
      %s467 = sphi 0, %s465
      %s468 = sphi 0, %s467
      %s482 = sphi 0, %s468
      %s486 = sphi 0, %s486
      %s488 = sphi 0, %s486
      %s489 = sphi 0, %s488
      %s503 = sphi 0, %s489
      %s507 = sphi 0, %s507
      %s509 = sphi 0, %s507
      %s510 = sphi 0, %s509
      %s524 = sphi 0, %s510
      %s528 = sphi 0, %s528
      %s530 = sphi 0, %s528
      %s531 = sphi 0, %s530
      %s545 = sphi 0, %s531
      %s553 = sphi 0, %s555
      %s556 = sphi 0, %s553
      %s557 = sphi 0, %s556
      %s573 = sphi 0, %s557
      %s581 = sphi 0, %s583
      %s584 = sphi 0, %s581
      %s585 = sphi 0, %s584
      %s601 = sphi 0, %s585
      %s609 = sphi 0, %s611
      %s612 = sphi 0, %s609
      %s613 = sphi 0, %s612
      %s629 = sphi 0, %s613
    $region4: #{tpu_custom_call.1} parent=1 // loop_header_branch
      %49 = sbr.rel (%p47) target = $region8
    $region5: #{tpu_custom_call.1} parent=1 // loop_body
      %s51 = ssub.s32 %s46, 1
      %s52 = ssub.s32 %s46, 2
      %s59 = sadd.s32 1, %s54
      %p60 = scmp.ge.s32.totalorder %s59, 1
      %s61 = scalar_select %p60, 0, %s59
      %s62 = sadd.s32 1, %s53
      %s63 = scalar_select %p60, %s62, %s53
      %p64 = scmp.ge.s32.totalorder %s63, 2
      %s65 = scalar_select %p64, 0, %s63
      %s66 = ssub.s32 %s53, %s65
      %s67 = ssub.s32 %s54, %s61
      %s68 = sor.u32 %s66, %s67
      %p69 = scmp.eq.s32.totalorder %s68, 0
      %s71 = sadd.s32 %s70, 1
      %s72 = scalar_select %p69, %s70, %s71
      %p75 = pneg %p69
      %p76 = scmp.eq.s32.totalorder %s46, 1
      %p77 = por %p75, %p76
      %p78 = scmp.ne.s32.totalorder %s70, %s73
      %p79 = scmp.eq.s32.totalorder %s46, 0
      %p80 = por %p78, %p79
      %p81 = scmp.ne.s32.totalorder %s70, %s73
      %p82 = scmp.eq.s32.totalorder %s51, 1
      %p83 = por %p81, %p82
      %p84 = scmp.ne.s32.totalorder %s73, %s74
      %p85 = scmp.eq.s32.totalorder %s51, 0
      %p86 = por %p84, %p85
      %p87 = scmp.ne.s32.totalorder %s73, %s74
      %p88 = scmp.eq.s32.totalorder %s52, 1
      %p89 = por %p87, %p88
      %p91 = scmp.ne.s32.totalorder %s74, %s90
      %p92 = scmp.eq.s32.totalorder %s52, 0
      %p93 = por %p91, %p92
      %s94 = ssub.s32 %s53, %s65
      %s95 = ssub.s32 %s54, %s61
      %s96 = sor.u32 %s94, %s95
      %p97 = scmp.eq.s32.totalorder %s96, 0
      %s99 = sadd.s32 %s98, 1
      %s100 = scalar_select %p97, %s98, %s99
      %p103 = pneg %p97
      %p104 = scmp.eq.s32.totalorder %s46, 1
      %p105 = por %p103, %p104
      %p106 = scmp.ne.s32.totalorder %s98, %s101
      %p107 = scmp.eq.s32.totalorder %s46, 0
      %p108 = por %p106, %p107
      %p109 = scmp.ne.s32.totalorder %s98, %s101
      %p110 = scmp.eq.s32.totalorder %s51, 1
      %p111 = por %p109, %p110
      %p112 = scmp.ne.s32.totalorder %s101, %s102
      %p113 = scmp.eq.s32.totalorder %s51, 0
      %p114 = por %p112, %p113
      %p115 = scmp.ne.s32.totalorder %s101, %s102
      %p116 = scmp.eq.s32.totalorder %s52, 1
      %p117 = por %p115, %p116
      %p119 = scmp.ne.s32.totalorder %s102, %s118
      %p120 = scmp.eq.s32.totalorder %s52, 0
      %p121 = por %p119, %p120
      %s122 = ssub.s32 %s53, %s65
      %s123 = ssub.s32 %s54, %s61
      %s124 = sor.u32 %s122, %s123
      %p125 = scmp.eq.s32.totalorder %s124, 0
      %s127 = sadd.s32 %s126, 1
      %s128 = scalar_select %p125, %s126, %s127
      %p131 = pneg %p125
      %p132 = scmp.eq.s32.totalorder %s46, 1
      %p133 = por %p131, %p132
      %p134 = scmp.ne.s32.totalorder %s126, %s129
      %p135 = scmp.eq.s32.totalorder %s46, 0
      %p136 = por %p134, %p135
      %p137 = scmp.ne.s32.totalorder %s126, %s129
      %p138 = scmp.eq.s32.totalorder %s51, 1
      %p139 = por %p137, %p138
      %p140 = scmp.ne.s32.totalorder %s129, %s130
      %p141 = scmp.eq.s32.totalorder %s51, 0
      %p142 = por %p140, %p141
      %p143 = scmp.ne.s32.totalorder %s129, %s130
      %p144 = scmp.eq.s32.totalorder %s52, 1
      %p145 = por %p143, %p144
      %p147 = scmp.ne.s32.totalorder %s130, %s146
      %p148 = scmp.eq.s32.totalorder %s52, 0
      %p149 = por %p147, %p148
      %s150 = ssub.s32 %s53, %s65
      %s151 = ssub.s32 %s54, %s61
      %s152 = sor.u32 %s150, %s151
      %p153 = scmp.eq.s32.totalorder %s152, 0
      %s155 = sadd.s32 %s154, 1
      %s156 = scalar_select %p153, %s154, %s155
      %p159 = pneg %p153
      %p160 = scmp.eq.s32.totalorder %s46, 1
      %p161 = por %p159, %p160
      %p162 = scmp.ne.s32.totalorder %s154, %s157
      %p163 = scmp.eq.s32.totalorder %s46, 0
      %p164 = por %p162, %p163
      %p165 = scmp.ne.s32.totalorder %s154, %s157
      %p166 = scmp.eq.s32.totalorder %s51, 1
      %p167 = por %p165, %p166
      %p168 = scmp.ne.s32.totalorder %s157, %s158
      %p169 = scmp.eq.s32.totalorder %s51, 0
      %p170 = por %p168, %p169
      %p171 = scmp.ne.s32.totalorder %s157, %s158
      %p172 = scmp.eq.s32.totalorder %s52, 1
      %p173 = por %p171, %p172
      %p175 = scmp.ne.s32.totalorder %s158, %s174
      %p176 = scmp.eq.s32.totalorder %s52, 0
      %p177 = por %p175, %p176
      %s178 = ssub.s32 %s53, %s65
      %s179 = ssub.s32 %s54, %s61
      %s180 = sor.u32 %s178, %s179
      %p181 = scmp.eq.s32.totalorder %s180, 0
      %s183 = sadd.s32 %s182, 1
      %s184 = scalar_select %p181, %s182, %s183
      %p187 = pneg %p181
      %p188 = scmp.eq.s32.totalorder %s46, 1
      %p189 = por %p187, %p188
      %p190 = scmp.ne.s32.totalorder %s182, %s185
      %p191 = scmp.eq.s32.totalorder %s46, 0
      %p192 = por %p190, %p191
      %p193 = scmp.ne.s32.totalorder %s182, %s185
      %p194 = scmp.eq.s32.totalorder %s51, 1
      %p195 = por %p193, %p194
      %p196 = scmp.ne.s32.totalorder %s185, %s186
      %p197 = scmp.eq.s32.totalorder %s51, 0
      %p198 = por %p196, %p197
      %p199 = scmp.ne.s32.totalorder %s185, %s186
      %p200 = scmp.eq.s32.totalorder %s52, 1
      %p201 = por %p199, %p200
      %p203 = scmp.ne.s32.totalorder %s186, %s202
      %p204 = scmp.eq.s32.totalorder %s52, 0
      %p205 = por %p203, %p204
      %s206 = ssub.s32 %s53, %s65
      %s207 = ssub.s32 %s54, %s61
      %s208 = sor.u32 %s206, %s207
      %p209 = scmp.eq.s32.totalorder %s208, 0
      %s211 = sadd.s32 %s210, 1
      %s212 = scalar_select %p209, %s210, %s211
      %p215 = pneg %p209
      %p216 = scmp.eq.s32.totalorder %s46, 1
      %p217 = por %p215, %p216
      %p218 = scmp.ne.s32.totalorder %s210, %s213
      %p219 = scmp.eq.s32.totalorder %s46, 0
      %p220 = por %p218, %p219
      %p221 = scmp.ne.s32.totalorder %s210, %s213
      %p222 = scmp.eq.s32.totalorder %s51, 1
      %p223 = por %p221, %p222
      %p224 = scmp.ne.s32.totalorder %s213, %s214
      %p225 = scmp.eq.s32.totalorder %s51, 0
      %p226 = por %p224, %p225
      %p227 = scmp.ne.s32.totalorder %s213, %s214
      %p228 = scmp.eq.s32.totalorder %s52, 1
      %p229 = por %p227, %p228
      %p231 = scmp.ne.s32.totalorder %s214, %s230
      %p232 = scmp.eq.s32.totalorder %s52, 0
      %p233 = por %p231, %p232
      %s234 = ssub.s32 %s53, %s65
      %s235 = ssub.s32 %s54, %s61
      %s236 = sor.u32 %s234, %s235
      %p237 = scmp.eq.s32.totalorder %s236, 0
      %s239 = sadd.s32 %s238, 1
      %s240 = scalar_select %p237, %s238, %s239
      %p243 = pneg %p237
      %p244 = scmp.eq.s32.totalorder %s46, 1
      %p245 = por %p243, %p244
      %p246 = scmp.ne.s32.totalorder %s238, %s241
      %p247 = scmp.eq.s32.totalorder %s46, 0
      %p248 = por %p246, %p247
      %p249 = scmp.ne.s32.totalorder %s238, %s241
      %p250 = scmp.eq.s32.totalorder %s51, 1
      %p251 = por %p249, %p250
      %p252 = scmp.ne.s32.totalorder %s241, %s242
      %p253 = scmp.eq.s32.totalorder %s51, 0
      %p254 = por %p252, %p253
      %p255 = scmp.ne.s32.totalorder %s241, %s242
      %p256 = scmp.eq.s32.totalorder %s52, 1
      %p257 = por %p255, %p256
      %p259 = scmp.ne.s32.totalorder %s242, %s258
      %p260 = scmp.eq.s32.totalorder %s52, 0
      %p261 = por %p259, %p260
      %s262 = ssub.s32 %s53, %s65
      %s263 = ssub.s32 %s54, %s61
      %s264 = sor.u32 %s262, %s263
      %p265 = scmp.eq.s32.totalorder %s264, 0
      %s267 = sadd.s32 %s266, 1
      %s268 = scalar_select %p265, %s266, %s267
      %p271 = pneg %p265
      %p272 = scmp.eq.s32.totalorder %s46, 1
      %p273 = por %p271, %p272
      %p274 = scmp.ne.s32.totalorder %s266, %s269
      %p275 = scmp.eq.s32.totalorder %s46, 0
      %p276 = por %p274, %p275
      %p277 = scmp.ne.s32.totalorder %s266, %s269
      %p278 = scmp.eq.s32.totalorder %s51, 1
      %p279 = por %p277, %p278
      %p280 = scmp.ne.s32.totalorder %s269, %s270
      %p281 = scmp.eq.s32.totalorder %s51, 0
      %p282 = por %p280, %p281
      %p283 = scmp.ne.s32.totalorder %s269, %s270
      %p284 = scmp.eq.s32.totalorder %s52, 1
      %p285 = por %p283, %p284
      %p287 = scmp.ne.s32.totalorder %s270, %s286
      %p288 = scmp.eq.s32.totalorder %s52, 0
      %p289 = por %p287, %p288
      %s290 = ssub.s32 %s53, %s65
      %s291 = ssub.s32 %s54, %s61
      %s292 = sor.u32 %s290, %s291
      %p293 = scmp.eq.s32.totalorder %s292, 0
      %s295 = sadd.s32 %s294, 1
      %s296 = scalar_select %p293, %s294, %s295
      %p299 = pneg %p293
      %p300 = scmp.eq.s32.totalorder %s46, 1
      %p301 = por %p299, %p300
      %p302 = scmp.ne.s32.totalorder %s294, %s297
      %p303 = scmp.eq.s32.totalorder %s46, 0
      %p304 = por %p302, %p303
      %p305 = scmp.ne.s32.totalorder %s294, %s297
      %p306 = scmp.eq.s32.totalorder %s51, 1
      %p307 = por %p305, %p306
      %p308 = scmp.ne.s32.totalorder %s297, %s298
      %p309 = scmp.eq.s32.totalorder %s51, 0
      %p310 = por %p308, %p309
      %p311 = scmp.ne.s32.totalorder %s297, %s298
      %p312 = scmp.eq.s32.totalorder %s52, 1
      %p313 = por %p311, %p312
      %p315 = scmp.ne.s32.totalorder %s298, %s314
      %p316 = scmp.eq.s32.totalorder %s52, 0
      %p317 = por %p315, %p316
      %s319 = sadd.s32 %s318, 1
      %p322 = scmp.eq.s32.totalorder %s46, 1
      %p323 = scmp.ne.s32.totalorder %s318, %s320
      %p324 = scmp.eq.s32.totalorder %s46, 0
      %p325 = por %p323, %p324
      %p326 = scmp.ne.s32.totalorder %s318, %s320
      %p327 = scmp.eq.s32.totalorder %s51, 1
      %p328 = por %p326, %p327
      %p329 = scmp.ne.s32.totalorder %s320, %s321
      %p330 = scmp.eq.s32.totalorder %s51, 0
      %p331 = por %p329, %p330
      %p332 = scmp.ne.s32.totalorder %s320, %s321
      %p333 = scmp.eq.s32.totalorder %s52, 1
      %p334 = por %p332, %p333
      %p336 = scmp.ne.s32.totalorder %s321, %s335
      %p337 = scmp.eq.s32.totalorder %s52, 0
      %p338 = por %p336, %p337
      %s340 = sadd.s32 %s339, 1
      %p343 = scmp.eq.s32.totalorder %s46, 1
      %p344 = scmp.ne.s32.totalorder %s339, %s341
      %p345 = scmp.eq.s32.totalorder %s46, 0
      %p346 = por %p344, %p345
      %p347 = scmp.ne.s32.totalorder %s339, %s341
      %p348 = scmp.eq.s32.totalorder %s51, 1
      %p349 = por %p347, %p348
      %p350 = scmp.ne.s32.totalorder %s341, %s342
      %p351 = scmp.eq.s32.totalorder %s51, 0
      %p352 = por %p350, %p351
      %p353 = scmp.ne.s32.totalorder %s341, %s342
      %p354 = scmp.eq.s32.totalorder %s52, 1
      %p355 = por %p353, %p354
      %p357 = scmp.ne.s32.totalorder %s342, %s356
      %p358 = scmp.eq.s32.totalorder %s52, 0
      %p359 = por %p357, %p358
      %s361 = sadd.s32 %s360, 1
      %p364 = scmp.eq.s32.totalorder %s46, 1
      %p365 = scmp.ne.s32.totalorder %s360, %s362
      %p366 = scmp.eq.s32.totalorder %s46, 0
      %p367 = por %p365, %p366
      %p368 = scmp.ne.s32.totalorder %s360, %s362
      %p369 = scmp.eq.s32.totalorder %s51, 1
      %p370 = por %p368, %p369
      %p371 = scmp.ne.s32.totalorder %s362, %s363
      %p372 = scmp.eq.s32.totalorder %s51, 0
      %p373 = por %p371, %p372
      %p374 = scmp.ne.s32.totalorder %s362, %s363
      %p375 = scmp.eq.s32.totalorder %s52, 1
      %p376 = por %p374, %p375
      %p378 = scmp.ne.s32.totalorder %s363, %s377
      %p379 = scmp.eq.s32.totalorder %s52, 0
      %p380 = por %p378, %p379
      %s382 = sadd.s32 %s381, 1
      %p385 = scmp.eq.s32.totalorder %s46, 1
      %p386 = scmp.ne.s32.totalorder %s381, %s383
      %p387 = scmp.eq.s32.totalorder %s46, 0
      %p388 = por %p386, %p387
      %p389 = scmp.ne.s32.totalorder %s381, %s383
      %p390 = scmp.eq.s32.totalorder %s51, 1
      %p391 = por %p389, %p390
      %p392 = scmp.ne.s32.totalorder %s383, %s384
      %p393 = scmp.eq.s32.totalorder %s51, 0
      %p394 = por %p392, %p393
      %p395 = scmp.ne.s32.totalorder %s383, %s384
      %p396 = scmp.eq.s32.totalorder %s52, 1
      %p397 = por %p395, %p396
      %p399 = scmp.ne.s32.totalorder %s384, %s398
      %p400 = scmp.eq.s32.totalorder %s52, 0
      %p401 = por %p399, %p400
      %s403 = sadd.s32 %s402, 1
      %p406 = scmp.eq.s32.totalorder %s46, 1
      %p407 = scmp.ne.s32.totalorder %s402, %s404
      %p408 = scmp.eq.s32.totalorder %s46, 0
      %p409 = por %p407, %p408
      %p410 = scmp.ne.s32.totalorder %s402, %s404
      %p411 = scmp.eq.s32.totalorder %s51, 1
      %p412 = por %p410, %p411
      %p413 = scmp.ne.s32.totalorder %s404, %s405
      %p414 = scmp.eq.s32.totalorder %s51, 0
      %p415 = por %p413, %p414
      %p416 = scmp.ne.s32.totalorder %s404, %s405
      %p417 = scmp.eq.s32.totalorder %s52, 1
      %p418 = por %p416, %p417
      %p420 = scmp.ne.s32.totalorder %s405, %s419
      %p421 = scmp.eq.s32.totalorder %s52, 0
      %p422 = por %p420, %p421
      %s424 = sadd.s32 %s423, 1
      %p427 = scmp.eq.s32.totalorder %s46, 1
      %p428 = scmp.ne.s32.totalorder %s423, %s425
      %p429 = scmp.eq.s32.totalorder %s46, 0
      %p430 = por %p428, %p429
      %p431 = scmp.ne.s32.totalorder %s423, %s425
      %p432 = scmp.eq.s32.totalorder %s51, 1
      %p433 = por %p431, %p432
      %p434 = scmp.ne.s32.totalorder %s425, %s426
      %p435 = scmp.eq.s32.totalorder %s51, 0
      %p436 = por %p434, %p435
      %p437 = scmp.ne.s32.totalorder %s425, %s426
      %p438 = scmp.eq.s32.totalorder %s52, 1
      %p439 = por %p437, %p438
      %p441 = scmp.ne.s32.totalorder %s426, %s440
      %p442 = scmp.eq.s32.totalorder %s52, 0
      %p443 = por %p441, %p442
      %s445 = sadd.s32 %s444, 1
      %p448 = scmp.eq.s32.totalorder %s46, 1
      %p449 = scmp.ne.s32.totalorder %s444, %s446
      %p450 = scmp.eq.s32.totalorder %s46, 0
      %p451 = por %p449, %p450
      %p452 = scmp.ne.s32.totalorder %s444, %s446
      %p453 = scmp.eq.s32.totalorder %s51, 1
      %p454 = por %p452, %p453
      %p455 = scmp.ne.s32.totalorder %s446, %s447
      %p456 = scmp.eq.s32.totalorder %s51, 0
      %p457 = por %p455, %p456
      %p458 = scmp.ne.s32.totalorder %s446, %s447
      %p459 = scmp.eq.s32.totalorder %s52, 1
      %p460 = por %p458, %p459
      %p462 = scmp.ne.s32.totalorder %s447, %s461
      %p463 = scmp.eq.s32.totalorder %s52, 0
      %p464 = por %p462, %p463
      %s466 = sadd.s32 %s465, 1
      %p469 = scmp.eq.s32.totalorder %s46, 1
      %p470 = scmp.ne.s32.totalorder %s465, %s467
      %p471 = scmp.eq.s32.totalorder %s46, 0
      %p472 = por %p470, %p471
      %p473 = scmp.ne.s32.totalorder %s465, %s467
      %p474 = scmp.eq.s32.totalorder %s51, 1
      %p475 = por %p473, %p474
      %p476 = scmp.ne.s32.totalorder %s467, %s468
      %p477 = scmp.eq.s32.totalorder %s51, 0
      %p478 = por %p476, %p477
      %p479 = scmp.ne.s32.totalorder %s467, %s468
      %p480 = scmp.eq.s32.totalorder %s52, 1
      %p481 = por %p479, %p480
      %p483 = scmp.ne.s32.totalorder %s468, %s482
      %p484 = scmp.eq.s32.totalorder %s52, 0
      %p485 = por %p483, %p484
      %s487 = sadd.s32 %s486, 1
      %p490 = scmp.eq.s32.totalorder %s46, 1
      %p491 = scmp.ne.s32.totalorder %s486, %s488
      %p492 = scmp.eq.s32.totalorder %s46, 0
      %p493 = por %p491, %p492
      %p494 = scmp.ne.s32.totalorder %s486, %s488
      %p495 = scmp.eq.s32.totalorder %s51, 1
      %p496 = por %p494, %p495
      %p497 = scmp.ne.s32.totalorder %s488, %s489
      %p498 = scmp.eq.s32.totalorder %s51, 0
      %p499 = por %p497, %p498
      %p500 = scmp.ne.s32.totalorder %s488, %s489
      %p501 = scmp.eq.s32.totalorder %s52, 1
      %p502 = por %p500, %p501
      %p504 = scmp.ne.s32.totalorder %s489, %s503
      %p505 = scmp.eq.s32.totalorder %s52, 0
      %p506 = por %p504, %p505
      %s508 = sadd.s32 %s507, 1
      %p511 = scmp.eq.s32.totalorder %s46, 1
      %p512 = scmp.ne.s32.totalorder %s507, %s509
      %p513 = scmp.eq.s32.totalorder %s46, 0
      %p514 = por %p512, %p513
      %p515 = scmp.ne.s32.totalorder %s507, %s509
      %p516 = scmp.eq.s32.totalorder %s51, 1
      %p517 = por %p515, %p516
      %p518 = scmp.ne.s32.totalorder %s509, %s510
      %p519 = scmp.eq.s32.totalorder %s51, 0
      %p520 = por %p518, %p519
      %p521 = scmp.ne.s32.totalorder %s509, %s510
      %p522 = scmp.eq.s32.totalorder %s52, 1
      %p523 = por %p521, %p522
      %p525 = scmp.ne.s32.totalorder %s510, %s524
      %p526 = scmp.eq.s32.totalorder %s52, 0
      %p527 = por %p525, %p526
      %s529 = sadd.s32 %s528, 1
      %p532 = scmp.eq.s32.totalorder %s46, 1
      %p533 = scmp.ne.s32.totalorder %s528, %s530
      %p534 = scmp.eq.s32.totalorder %s46, 0
      %p535 = por %p533, %p534
      %p536 = scmp.ne.s32.totalorder %s528, %s530
      %p537 = scmp.eq.s32.totalorder %s51, 1
      %p538 = por %p536, %p537
      %p539 = scmp.ne.s32.totalorder %s530, %s531
      %p540 = scmp.eq.s32.totalorder %s51, 0
      %p541 = por %p539, %p540
      %p542 = scmp.ne.s32.totalorder %s530, %s531
      %p543 = scmp.eq.s32.totalorder %s52, 1
      %p544 = por %p542, %p543
      %p546 = scmp.ne.s32.totalorder %s531, %s545
      %p547 = scmp.eq.s32.totalorder %s52, 0
      %p548 = por %p546, %p547
      %s549 = ssub.s32 %s53, %s65
      %s550 = ssub.s32 %s54, %s61
      %s551 = sor.u32 %s549, %s550
      %p552 = scmp.eq.s32.totalorder %s551, 0
      %s554 = sadd.s32 %s553, 1
      %s555 = scalar_select %p552, %s553, %s554
      %p558 = pneg %p552
      %p559 = scmp.eq.s32.totalorder %s46, 1
      %p560 = por %p558, %p559
      %p561 = scmp.ne.s32.totalorder %s553, %s556
      %p562 = scmp.eq.s32.totalorder %s46, 0
      %p563 = por %p561, %p562
      %p564 = scmp.ne.s32.totalorder %s553, %s556
      %p565 = scmp.eq.s32.totalorder %s51, 1
      %p566 = por %p564, %p565
      %p567 = scmp.ne.s32.totalorder %s556, %s557
      %p568 = scmp.eq.s32.totalorder %s51, 0
      %p569 = por %p567, %p568
      %p570 = scmp.ne.s32.totalorder %s556, %s557
      %p571 = scmp.eq.s32.totalorder %s52, 1
      %p572 = por %p570, %p571
      %p574 = scmp.ne.s32.totalorder %s557, %s573
      %p575 = scmp.eq.s32.totalorder %s52, 0
      %p576 = por %p574, %p575
      %s577 = ssub.s32 %s53, %s65
      %s578 = ssub.s32 %s54, %s61
      %s579 = sor.u32 %s577, %s578
      %p580 = scmp.eq.s32.totalorder %s579, 0
      %s582 = sadd.s32 %s581, 1
      %s583 = scalar_select %p580, %s581, %s582
      %p586 = pneg %p580
      %p587 = scmp.eq.s32.totalorder %s46, 1
      %p588 = por %p586, %p587
      %p589 = scmp.ne.s32.totalorder %s581, %s584
      %p590 = scmp.eq.s32.totalorder %s46, 0
      %p591 = por %p589, %p590
      %p592 = scmp.ne.s32.totalorder %s581, %s584
      %p593 = scmp.eq.s32.totalorder %s51, 1
      %p594 = por %p592, %p593
      %p595 = scmp.ne.s32.totalorder %s584, %s585
      %p596 = scmp.eq.s32.totalorder %s51, 0
      %p597 = por %p595, %p596
      %p598 = scmp.ne.s32.totalorder %s584, %s585
      %p599 = scmp.eq.s32.totalorder %s52, 1
      %p600 = por %p598, %p599
      %p602 = scmp.ne.s32.totalorder %s585, %s601
      %p603 = scmp.eq.s32.totalorder %s52, 0
      %p604 = por %p602, %p603
      %s605 = ssub.s32 %s53, %s65
      %s606 = ssub.s32 %s54, %s61
      %s607 = sor.u32 %s605, %s606
      %p608 = scmp.eq.s32.totalorder %s607, 0
      %s610 = sadd.s32 %s609, 1
      %s611 = scalar_select %p608, %s609, %s610
      %p614 = pneg %p608
      %p615 = scmp.eq.s32.totalorder %s46, 1
      %p616 = por %p614, %p615
      %p617 = scmp.ne.s32.totalorder %s609, %s612
      %p618 = scmp.eq.s32.totalorder %s46, 0
      %p619 = por %p617, %p618
      %p620 = scmp.ne.s32.totalorder %s609, %s612
      %p621 = scmp.eq.s32.totalorder %s51, 1
      %p622 = por %p620, %p621
      %p623 = scmp.ne.s32.totalorder %s612, %s613
      %p624 = scmp.eq.s32.totalorder %s51, 0
      %p625 = por %p623, %p624
      %p626 = scmp.ne.s32.totalorder %s612, %s613
      %p627 = scmp.eq.s32.totalorder %s52, 1
      %p628 = por %p626, %p627
      %p630 = scmp.ne.s32.totalorder %s613, %s629
      %p631 = scmp.eq.s32.totalorder %s52, 0
      %p632 = por %p630, %p631
      %p633 = scmp.le.s32.totalorder 1, %s46
      %p634 = scmp.lt.s32.totalorder %s46, 3
      %p635 = pnand %p633, %p634
      %p636 = pneg %p635
      // Predicated region
      $region9: #{tpu_custom_call.1} parent=5 // pred_check
        _
      $region10: #{tpu_custom_call.1} parent=5 // pred_check_branch
        %638 = sbr.rel (%p635) target = $region12
      $region11: #{tpu_custom_call.1} parent=5 // pred_region
        %s639 = ssub.s32 %s46, 1
        // Predicated region
        $region13: #{tpu_custom_call.1} parent=11 // pred_check
          %p640 = pneg %p331
        $region14: #{tpu_custom_call.1} parent=11 // pred_check_branch
          %642 = sbr.rel (%p640) target = $region16
        $region15: #{tpu_custom_call.1} parent=11 // pred_region
          _
        $region16: #{tpu_custom_call.1} parent=11 // pred_fallthru
          _
        // Predicated region
        $region17: #{tpu_custom_call.1} parent=11 // pred_check
          %p643 = pneg %p352
        $region18: #{tpu_custom_call.1} parent=11 // pred_check_branch
          %645 = sbr.rel (%p643) target = $region20
        $region19: #{tpu_custom_call.1} parent=11 // pred_region
          %s647 = ssub.s32 32, 32
          %648 = vsyncadd [#allocation12], %s647
          %s650 = sshll.u32 [#allocation11], 4
          %s651 = int_to_ptr.vmem [resolvable:$true] %s650
          %653 = dma.hbm_to_vmem [thread:$0]  %s10, 32, %s651, [#allocation12]
        $region20: #{tpu_custom_call.1} parent=11 // pred_fallthru
          _
        // Predicated region
        $region21: #{tpu_custom_call.1} parent=11 // pred_check
          %p654 = pneg %p373
        $region22: #{tpu_custom_call.1} parent=11 // pred_check_branch
          %656 = sbr.rel (%p654) target = $region24
        $region23: #{tpu_custom_call.1} parent=11 // pred_region
          _
        $region24: #{tpu_custom_call.1} parent=11 // pred_fallthru
          _
        // Predicated region
        $region25: #{tpu_custom_call.1} parent=11 // pred_check
          %p657 = pneg %p394
        $region26: #{tpu_custom_call.1} parent=11 // pred_check_branch
          %659 = sbr.rel (%p657) target = $region28
        $region27: #{tpu_custom_call.1} parent=11 // pred_region
          %s661 = ssub.s32 16, 16
          %662 = vsyncadd [#allocation12], %s661
          %s664 = sshll.u32 [#allocation13], 4
          %s665 = int_to_ptr.vmem [resolvable:$true] %s664
          %667 = dma.hbm_to_vmem [thread:$0]  %s12, 16, %s665, [#allocation12]
        $region28: #{tpu_custom_call.1} parent=11 // pred_fallthru
          _
        // Predicated region
        $region29: #{tpu_custom_call.1} parent=11 // pred_check
          %p668 = pneg %p415
        $region30: #{tpu_custom_call.1} parent=11 // pred_check_branch
          %670 = sbr.rel (%p668) target = $region32
        $region31: #{tpu_custom_call.1} parent=11 // pred_region
          %s672 = ssub.s32 16, 16
          %673 = vsyncadd [#allocation15], %s672
          %s675 = sshll.u32 [#allocation14], 4
          %s676 = int_to_ptr.vmem [resolvable:$true] %s675
          %678 = dma.hbm_to_vmem [thread:$0]  %s13, 16, %s676, [#allocation15]
        $region32: #{tpu_custom_call.1} parent=11 // pred_fallthru
          _
        // Predicated region
        $region33: #{tpu_custom_call.1} parent=11 // pred_check
          %p679 = pneg %p436
        $region34: #{tpu_custom_call.1} parent=11 // pred_check_branch
          %681 = sbr.rel (%p679) target = $region36
        $region35: #{tpu_custom_call.1} parent=11 // pred_region
          _
        $region36: #{tpu_custom_call.1} parent=11 // pred_fallthru
          _
        // Predicated region
        $region37: #{tpu_custom_call.1} parent=11 // pred_check
          %p682 = pneg %p457
        $region38: #{tpu_custom_call.1} parent=11 // pred_check_branch
          %684 = sbr.rel (%p682) target = $region40
        $region39: #{tpu_custom_call.1} parent=11 // pred_region
          _
        $region40: #{tpu_custom_call.1} parent=11 // pred_fallthru
          _
        // Predicated region
        $region41: #{tpu_custom_call.1} parent=11 // pred_check
          %p685 = pneg %p478
        $region42: #{tpu_custom_call.1} parent=11 // pred_check_branch
          %687 = sbr.rel (%p685) target = $region44
        $region43: #{tpu_custom_call.1} parent=11 // pred_region
          _
        $region44: #{tpu_custom_call.1} parent=11 // pred_fallthru
          _
        // Predicated region
        $region45: #{tpu_custom_call.1} parent=11 // pred_check
          %p688 = pneg %p499
        $region46: #{tpu_custom_call.1} parent=11 // pred_check_branch
          %690 = sbr.rel (%p688) target = $region48
        $region47: #{tpu_custom_call.1} parent=11 // pred_region
          _
        $region48: #{tpu_custom_call.1} parent=11 // pred_fallthru
          _
        // Predicated region
        $region49: #{tpu_custom_call.1} parent=11 // pred_check
          %p691 = pneg %p520
        $region50: #{tpu_custom_call.1} parent=11 // pred_check_branch
          %693 = sbr.rel (%p691) target = $region52
        $region51: #{tpu_custom_call.1} parent=11 // pred_region
          _
        $region52: #{tpu_custom_call.1} parent=11 // pred_fallthru
          _
        // Predicated region
        $region53: #{tpu_custom_call.1} parent=11 // pred_check
          %p694 = pneg %p541
        $region54: #{tpu_custom_call.1} parent=11 // pred_check_branch
          %696 = sbr.rel (%p694) target = $region56
        $region55: #{tpu_custom_call.1} parent=11 // pred_region
          _
        $region56: #{tpu_custom_call.1} parent=11 // pred_fallthru
          _
      $region12: #{tpu_custom_call.1} parent=5 // pred_fallthru
        _
      %p697 = scmp.lt.s32.totalorder %s46, 2
      // Predicated region
      $region57: #{tpu_custom_call.1} parent=5 // pred_check
        %p698 = pneg %p697
      $region58: #{tpu_custom_call.1} parent=5 // pred_check_branch
        %700 = sbr.rel (%p698) target = $region60
      $region59: #{tpu_custom_call.1} parent=5 // pred_region
        // Predicated region
        $region61: #{tpu_custom_call.1} parent=59 // pred_check
          %p701 = pneg %p80
        $region62: #{tpu_custom_call.1} parent=59 // pred_check_branch
          %703 = sbr.rel (%p701) target = $region64
        $region63: #{tpu_custom_call.1} parent=59 // pred_region
          %s704 = smul.u32 2, %s54
          %p705 = scmp.lt.s32.totalorder %s53, 1
          %s706 = scalar_select %p705, %s53, 1
          %p707 = scmp.lt.s32.totalorder %s704, 1
          %s708 = scalar_select %p707, %s704, 1
          %s709 = smul.addr %s706, 2
          %s710 = sadd.s32 %s708, %s709
          %s711 = smul.addr %s710, 8
          %s712 = scalar_lea.vmem %s0, %s711
          %s713 = smul.u32 2, %s54
        $region64: #{tpu_custom_call.1} parent=59 // pred_fallthru
          _
        // Predicated region
        $region65: #{tpu_custom_call.1} parent=59 // pred_check
          %p714 = pneg %p108
        $region66: #{tpu_custom_call.1} parent=59 // pred_check_branch
          %716 = sbr.rel (%p714) target = $region68
        $region67: #{tpu_custom_call.1} parent=59 // pred_region
          %s717 = smul.u32 2, %s54
          %p718 = scmp.lt.s32.totalorder %s53, 1
          %s719 = scalar_select %p718, %s53, 1
          %p720 = scmp.lt.s32.totalorder %s717, 1
          %s721 = scalar_select %p720, %s717, 1
          %s722 = smul.addr %s719, 2
          %s723 = sadd.s32 %s721, %s722
          %s724 = smul.addr %s723, 8
          %s725 = scalar_lea.vmem %s1, %s724
          %s726 = smul.u32 2, %s54
        $region68: #{tpu_custom_call.1} parent=59 // pred_fallthru
          _
        // Predicated region
        $region69: #{tpu_custom_call.1} parent=59 // pred_check
          %p727 = pneg %p136
        $region70: #{tpu_custom_call.1} parent=59 // pred_check_branch
          %729 = sbr.rel (%p727) target = $region72
        $region71: #{tpu_custom_call.1} parent=59 // pred_region
          %s730 = smul.u32 2, %s54
          %p731 = scmp.lt.s32.totalorder %s53, 1
          %s732 = scalar_select %p731, %s53, 1
          %p733 = scmp.lt.s32.totalorder %s730, 1
          %s734 = scalar_select %p733, %s730, 1
          %s735 = smul.addr %s732, 2
          %s736 = sadd.s32 %s734, %s735
          %s737 = smul.addr %s736, 8
          %s738 = scalar_lea.vmem %s2, %s737
          %s739 = smul.u32 2, %s54
        $region72: #{tpu_custom_call.1} parent=59 // pred_fallthru
          _
        // Predicated region
        $region73: #{tpu_custom_call.1} parent=59 // pred_check
          %p740 = pneg %p164
        $region74: #{tpu_custom_call.1} parent=59 // pred_check_branch
          %742 = sbr.rel (%p740) target = $region76
        $region75: #{tpu_custom_call.1} parent=59 // pred_region
          %s743 = smul.u32 2, %s54
          %p744 = scmp.lt.s32.totalorder %s53, 1
          %s745 = scalar_select %p744, %s53, 1
          %p746 = scmp.lt.s32.totalorder %s743, 1
          %s747 = scalar_select %p746, %s743, 1
          %s748 = smul.addr %s745, 2
          %s749 = sadd.s32 %s747, %s748
          %s750 = smul.addr %s749, 8
          %s751 = scalar_lea.vmem %s3, %s750
          %s752 = smul.u32 2, %s54
        $region76: #{tpu_custom_call.1} parent=59 // pred_fallthru
          _
        // Predicated region
        $region77: #{tpu_custom_call.1} parent=59 // pred_check
          %p753 = pneg %p192
        $region78: #{tpu_custom_call.1} parent=59 // pred_check_branch
          %755 = sbr.rel (%p753) target = $region80
        $region79: #{tpu_custom_call.1} parent=59 // pred_region
          %s756 = sand.u32 %s182, 1
          %s757 = scalar_lea.sflag [#allocation3], %s756
          %s758 = sand.u32 %s182, 1
          %s759 = smul.addr %s758, 16
          %s760 = scalar_lea.vmem [#allocation2], %s759
          %s761 = smul.u32 2, %s54
          %s763 = ssub.s32 256, 256
          %764 = vsyncadd %s757, %s763
          %s765 = smul.addr %s53, 2
          %s766 = sadd.s32 %s761, %s765
          %s767 = smul.addr %s766, 128
          %s768 = scalar_lea.hbm %s4, %s767
          %s769 = sshll.u32 %s760, 4
          %s770 = int_to_ptr.vmem [resolvable:$true] %s769
          %775 = dma.hbm_to_vmem [thread:$0]  %s768, 256, %s770, %s757, 128, 128, 8
        $region80: #{tpu_custom_call.1} parent=59 // pred_fallthru
          _
        // Predicated region
        $region81: #{tpu_custom_call.1} parent=59 // pred_check
          %p776 = pneg %p220
        $region82: #{tpu_custom_call.1} parent=59 // pred_check_branch
          %778 = sbr.rel (%p776) target = $region84
        $region83: #{tpu_custom_call.1} parent=59 // pred_region
          %s779 = sand.u32 %s46, 1
          %s780 = scalar_lea.sflag [#allocation6], %s779
          %s781 = sand.u32 %s210, 1
          %s782 = smul.addr %s781, 16
          %s783 = scalar_lea.vmem [#allocation5], %s782
          %s784 = smul.u32 2, %s54
          %s786 = ssub.s32 256, 256
          %787 = vsyncadd %s780, %s786
          %s788 = smul.addr %s53, 2
          %s789 = sadd.s32 %s784, %s788
          %s790 = smul.addr %s789, 128
          %s791 = scalar_lea.hbm %s5, %s790
          %s792 = sshll.u32 %s783, 4
          %s793 = int_to_ptr.vmem [resolvable:$true] %s792
          %798 = dma.hbm_to_vmem [thread:$0]  %s791, 256, %s793, %s780, 128, 128, 8
        $region84: #{tpu_custom_call.1} parent=59 // pred_fallthru
          _
        // Predicated region
        $region85: #{tpu_custom_call.1} parent=59 // pred_check
          %p799 = pneg %p248
        $region86: #{tpu_custom_call.1} parent=59 // pred_check_branch
          %801 = sbr.rel (%p799) target = $region88
        $region87: #{tpu_custom_call.1} parent=59 // pred_region
          %s802 = sand.u32 %s46, 1
          %s803 = scalar_lea.sflag [#allocation6], %s802
          %s804 = sand.u32 %s238, 1
          %s805 = smul.addr %s804, 16
          %s806 = scalar_lea.vmem [#allocation7], %s805
          %s807 = smul.u32 2, %s54
          %s809 = ssub.s32 256, 256
          %810 = vsyncadd %s803, %s809
          %s811 = smul.addr %s53, 2
          %s812 = sadd.s32 %s807, %s811
          %s813 = smul.addr %s812, 128
          %s814 = scalar_lea.hbm %s6, %s813
          %s815 = sshll.u32 %s806, 4
          %s816 = int_to_ptr.vmem [resolvable:$true] %s815
          %821 = dma.hbm_to_vmem [thread:$0]  %s814, 256, %s816, %s803, 128, 128, 8
        $region88: #{tpu_custom_call.1} parent=59 // pred_fallthru
          _
        // Predicated region
        $region89: #{tpu_custom_call.1} parent=59 // pred_check
          %p822 = pneg %p276
        $region90: #{tpu_custom_call.1} parent=59 // pred_check_branch
          %824 = sbr.rel (%p822) target = $region92
        $region91: #{tpu_custom_call.1} parent=59 // pred_region
          %s825 = sand.u32 %s46, 1
          %s826 = scalar_lea.sflag [#allocation9], %s825
          %s827 = sand.u32 %s266, 1
          %s828 = smul.addr %s827, 16
          %s829 = scalar_lea.vmem [#allocation8], %s828
          %s830 = smul.u32 2, %s54
          %s832 = ssub.s32 256, 256
          %833 = vsyncadd %s826, %s832
          %s834 = smul.addr %s53, 2
          %s835 = sadd.s32 %s830, %s834
          %s836 = smul.addr %s835, 128
          %s837 = scalar_lea.hbm %s7, %s836
          %s838 = sshll.u32 %s829, 4
          %s839 = int_to_ptr.vmem [resolvable:$true] %s838
          %844 = dma.hbm_to_vmem [thread:$0]  %s837, 256, %s839, %s826, 128, 128, 8
        $region92: #{tpu_custom_call.1} parent=59 // pred_fallthru
          _
        // Predicated region
        $region93: #{tpu_custom_call.1} parent=59 // pred_check
          %p845 = pneg %p304
        $region94: #{tpu_custom_call.1} parent=59 // pred_check_branch
          %847 = sbr.rel (%p845) target = $region96
        $region95: #{tpu_custom_call.1} parent=59 // pred_region
          %s848 = sand.u32 %s46, 1
          %s849 = scalar_lea.sflag [#allocation9], %s848
          %s850 = sand.u32 %s294, 1
          %s851 = smul.addr %s850, 16
          %s852 = scalar_lea.vmem [#allocation10], %s851
          %s853 = smul.u32 2, %s54
          %s855 = ssub.s32 256, 256
          %856 = vsyncadd %s849, %s855
          %s857 = smul.addr %s53, 2
          %s858 = sadd.s32 %s853, %s857
          %s859 = smul.addr %s858, 128
          %s860 = scalar_lea.hbm %s8, %s859
          %s861 = sshll.u32 %s852, 4
          %s862 = int_to_ptr.vmem [resolvable:$true] %s861
          %867 = dma.hbm_to_vmem [thread:$0]  %s860, 256, %s862, %s849, 128, 128, 8
        $region96: #{tpu_custom_call.1} parent=59 // pred_fallthru
          _
      $region60: #{tpu_custom_call.1} parent=5 // pred_fallthru
        _
      %p868 = scmp.le.s32.totalorder 1, %s46
      %p869 = scmp.lt.s32.totalorder %s46, 3
      %p870 = pnand %p868, %p869
      %p871 = pneg %p870
      // Predicated region
      $region97: #{tpu_custom_call.1} parent=5 // pred_check
        _
      $region98: #{tpu_custom_call.1} parent=5 // pred_check_branch
        %873 = sbr.rel (%p870) target = $region100
      $region99: #{tpu_custom_call.1} parent=5 // pred_region
        %s874 = ssub.s32 %s46, 1
        %s875 = sand.u32 %s185, 1
        %s876 = scalar_lea.sflag [#allocation3], %s875
        %s877 = sand.u32 %s185, 1
        %s878 = smul.addr %s877, 16
        %s879 = scalar_lea.vmem [#allocation2], %s878
        // Predicated region
        $region101: #{tpu_custom_call.1} parent=99 // pred_check
          %p880 = pneg %p198
        $region102: #{tpu_custom_call.1} parent=99 // pred_check_branch
          %882 = sbr.rel (%p880) target = $region104
        $region103: #{tpu_custom_call.1} parent=99 // pred_region
          %883 = dma.done %s876, 256
        $region104: #{tpu_custom_call.1} parent=99 // pred_fallthru
          _
        %s884 = sand.u32 %s51, 1
        %s885 = scalar_lea.sflag [#allocation6], %s884
        %s886 = sand.u32 %s213, 1
        %s887 = smul.addr %s886, 16
        %s888 = scalar_lea.vmem [#allocation5], %s887
        // Predicated region
        $region105: #{tpu_custom_call.1} parent=99 // pred_check
          %p889 = pneg %p226
        $region106: #{tpu_custom_call.1} parent=99 // pred_check_branch
          %891 = sbr.rel (%p889) target = $region108
        $region107: #{tpu_custom_call.1} parent=99 // pred_region
          %892 = dma.done %s885, 256
        $region108: #{tpu_custom_call.1} parent=99 // pred_fallthru
          _
        %s893 = sand.u32 %s51, 1
        %s894 = scalar_lea.sflag [#allocation6], %s893
        %s895 = sand.u32 %s241, 1
        %s896 = smul.addr %s895, 16
        %s897 = scalar_lea.vmem [#allocation7], %s896
        // Predicated region
        $region109: #{tpu_custom_call.1} parent=99 // pred_check
          %p898 = pneg %p254
        $region110: #{tpu_custom_call.1} parent=99 // pred_check_branch
          %900 = sbr.rel (%p898) target = $region112
        $region111: #{tpu_custom_call.1} parent=99 // pred_region
          %901 = dma.done %s894, 256
        $region112: #{tpu_custom_call.1} parent=99 // pred_fallthru
          _
        %s902 = sand.u32 %s51, 1
        %s903 = scalar_lea.sflag [#allocation9], %s902
        %s904 = sand.u32 %s269, 1
        %s905 = smul.addr %s904, 16
        %s906 = scalar_lea.vmem [#allocation8], %s905
        // Predicated region
        $region113: #{tpu_custom_call.1} parent=99 // pred_check
          %p907 = pneg %p282
        $region114: #{tpu_custom_call.1} parent=99 // pred_check_branch
          %909 = sbr.rel (%p907) target = $region116
        $region115: #{tpu_custom_call.1} parent=99 // pred_region
          %910 = dma.done %s903, 256
        $region116: #{tpu_custom_call.1} parent=99 // pred_fallthru
          _
        %s911 = sand.u32 %s51, 1
        %s912 = scalar_lea.sflag [#allocation9], %s911
        %s913 = sand.u32 %s297, 1
        %s914 = smul.addr %s913, 16
        %s915 = scalar_lea.vmem [#allocation10], %s914
        // Predicated region
        $region117: #{tpu_custom_call.1} parent=99 // pred_check
          %p916 = pneg %p310
        $region118: #{tpu_custom_call.1} parent=99 // pred_check_branch
          %918 = sbr.rel (%p916) target = $region120
        $region119: #{tpu_custom_call.1} parent=99 // pred_region
          %919 = dma.done %s912, 256
        $region120: #{tpu_custom_call.1} parent=99 // pred_fallthru
          _
        // Predicated region
        $region121: #{tpu_custom_call.1} parent=99 // pred_check
          %p920 = pneg %p352
        $region122: #{tpu_custom_call.1} parent=99 // pred_check_branch
          %922 = sbr.rel (%p920) target = $region124
        $region123: #{tpu_custom_call.1} parent=99 // pred_region
          %923 = dma.done [#allocation12], 32
        $region124: #{tpu_custom_call.1} parent=99 // pred_fallthru
          _
        // Predicated region
        $region125: #{tpu_custom_call.1} parent=99 // pred_check
          %p924 = pneg %p394
        $region126: #{tpu_custom_call.1} parent=99 // pred_check_branch
          %926 = sbr.rel (%p924) target = $region128
        $region127: #{tpu_custom_call.1} parent=99 // pred_region
          %927 = dma.done [#allocation12], 16
        $region128: #{tpu_custom_call.1} parent=99 // pred_fallthru
          _
        // Predicated region
        $region129: #{tpu_custom_call.1} parent=99 // pred_check
          %p928 = pneg %p415
        $region130: #{tpu_custom_call.1} parent=99 // pred_check_branch
          %930 = sbr.rel (%p928) target = $region132
        $region131: #{tpu_custom_call.1} parent=99 // pred_region
          %931 = dma.done [#allocation15], 16
        $region132: #{tpu_custom_call.1} parent=99 // pred_fallthru
          _
        %s932 = smul.u32 2, %s56
        %p933 = scmp.lt.s32.totalorder %s55, 1
        %s934 = scalar_select %p933, %s55, 1
        %p935 = scmp.lt.s32.totalorder %s932, 1
        %s936 = scalar_select %p935, %s932, 1
        %s937 = smul.addr %s934, 2
        %s938 = sadd.s32 %s936, %s937
        %s939 = smul.addr %s938, 8
        %s940 = scalar_lea.vmem %s0, %s939
        %p941 = pneg %p86
        %p942 = pneg %p83
        %s943 = smul.u32 2, %s56
        %p944 = scmp.lt.s32.totalorder %s55, 1
        %s945 = scalar_select %p944, %s55, 1
        %p946 = scmp.lt.s32.totalorder %s943, 1
        %s947 = scalar_select %p946, %s943, 1
        %s948 = smul.addr %s945, 2
        %s949 = sadd.s32 %s947, %s948
        %s950 = smul.addr %s949, 8
        %s951 = scalar_lea.vmem %s1, %s950
        %p952 = pneg %p114
        %p953 = pneg %p111
        %s954 = smul.u32 2, %s56
        %p955 = scmp.lt.s32.totalorder %s55, 1
        %s956 = scalar_select %p955, %s55, 1
        %p957 = scmp.lt.s32.totalorder %s954, 1
        %s958 = scalar_select %p957, %s954, 1
        %s959 = smul.addr %s956, 2
        %s960 = sadd.s32 %s958, %s959
        %s961 = smul.addr %s960, 8
        %s962 = scalar_lea.vmem %s2, %s961
        %p963 = pneg %p142
        %p964 = pneg %p139
        %s965 = smul.u32 2, %s56
        %p966 = scmp.lt.s32.totalorder %s55, 1
        %s967 = scalar_select %p966, %s55, 1
        %p968 = scmp.lt.s32.totalorder %s965, 1
        %s969 = scalar_select %p968, %s965, 1
        %s970 = smul.addr %s967, 2
        %s971 = sadd.s32 %s969, %s970
        %s972 = smul.addr %s971, 8
        %s973 = scalar_lea.vmem %s3, %s972
        %p974 = pneg %p170
        %p975 = pneg %p167
        %s976 = sand.u32 %s185, 1
        %s977 = scalar_lea.sflag [#allocation3], %s976
        %s978 = sand.u32 %s185, 1
        %s979 = smul.addr %s978, 16
        %s980 = scalar_lea.vmem [#allocation2], %s979
        %p981 = pneg %p198
        %p982 = pneg %p195
        %s983 = sand.u32 %s51, 1
        %s984 = scalar_lea.sflag [#allocation6], %s983
        %s985 = sand.u32 %s213, 1
        %s986 = smul.addr %s985, 16
        %s987 = scalar_lea.vmem [#allocation5], %s986
        %p988 = pneg %p226
        %p989 = pneg %p223
        %s990 = sand.u32 %s51, 1
        %s991 = scalar_lea.sflag [#allocation6], %s990
        %s992 = sand.u32 %s241, 1
        %s993 = smul.addr %s992, 16
        %s994 = scalar_lea.vmem [#allocation7], %s993
        %p995 = pneg %p254
        %p996 = pneg %p251
        %s997 = sand.u32 %s51, 1
        %s998 = scalar_lea.sflag [#allocation9], %s997
        %s999 = sand.u32 %s269, 1
        %s1000 = smul.addr %s999, 16
        %s1001 = scalar_lea.vmem [#allocation8], %s1000
        %p1002 = pneg %p282
        %p1003 = pneg %p279
        %s1004 = sand.u32 %s51, 1
        %s1005 = scalar_lea.sflag [#allocation9], %s1004
        %s1006 = sand.u32 %s297, 1
        %s1007 = smul.addr %s1006, 16
        %s1008 = scalar_lea.vmem [#allocation10], %s1007
        %p1009 = pneg %p310
        %p1010 = pneg %p307
        %p1011 = pneg %p331
        %p1012 = pneg %p328
        %p1013 = pneg %p352
        %p1014 = pneg %p349
        %p1015 = pneg %p373
        %p1016 = pneg %p370
        %p1017 = pneg %p394
        %p1018 = pneg %p391
        %p1019 = pneg %p415
        %p1020 = pneg %p412
        %p1021 = pneg %p436
        %p1022 = pneg %p433
        %p1023 = pneg %p457
        %p1024 = pneg %p454
        %p1025 = pneg %p478
        %p1026 = pneg %p475
        %p1027 = pneg %p499
        %p1028 = pneg %p496
        %p1029 = pneg %p520
        %p1030 = pneg %p517
        %p1031 = pneg %p541
        %p1032 = pneg %p538
        %p1033 = pneg %p569
        %p1034 = pneg %p566
        %s1035 = sand.u32 %s556, 1
        %s1036 = scalar_lea.sflag [#allocation4], %s1035
        %s1037 = sand.u32 %s556, 1
        %s1038 = smul.addr %s1037, 16
        %s1039 = scalar_lea.vmem [#allocation16], %s1038
        %p1040 = pneg %p597
        %p1041 = pneg %p594
        %p1042 = scmp.lt.s32.totalorder %s55, 1
        %s1043 = scalar_select %p1042, %s55, 1
        %p1044 = scmp.lt.s32.totalorder %s56, 0
        %s1045 = scalar_select %p1044, %s56, 0
        %s1046 = sadd.s32 %s1045, %s1043
        %s1047 = smul.addr %s1046, 8
        %s1048 = scalar_lea.vmem %s21, %s1047
        %p1049 = pneg %p625
        %p1050 = pneg %p622
        %s1051 = sand.u32 %s612, 1
        %s1052 = scalar_lea.sflag [#allocation18], %s1051
        %s1053 = sand.u32 %s612, 1
        %s1054 = smul.addr %s1053, 8
        %s1055 = scalar_lea.vmem [#allocation17], %s1054
        %s1056 = smul.u32 2, %s56
        %p1057 = scmp.lt.s32.totalorder %s55, 1
        %s1058 = scalar_select %p1057, %s55, 1
        %p1059 = scmp.lt.s32.totalorder %s1056, 1
        %s1060 = scalar_select %p1059, %s1056, 1
        %s1061 = smul.addr %s1058, 2
        %s1062 = sadd.s32 %s1060, %s1061
        %s1063 = smul.addr %s1062, 8
        %s1064 = scalar_lea.vmem %s0, %s1063
        %s1065 = smul.u32 2, %s56
        %s1066 = smul.u32 2, %s56
        %p1067 = scmp.lt.s32.totalorder %s55, 1
        %s1068 = scalar_select %p1067, %s55, 1
        %p1069 = scmp.lt.s32.totalorder %s1066, 1
        %s1070 = scalar_select %p1069, %s1066, 1
        %s1071 = smul.addr %s1068, 2
        %s1072 = sadd.s32 %s1070, %s1071
        %s1073 = smul.addr %s1072, 8
        %s1074 = scalar_lea.vmem %s1, %s1073
        %s1075 = smul.u32 2, %s56
        %s1076 = smul.u32 2, %s56
        %p1077 = scmp.lt.s32.totalorder %s55, 1
        %s1078 = scalar_select %p1077, %s55, 1
        %p1079 = scmp.lt.s32.totalorder %s1076, 1
        %s1080 = scalar_select %p1079, %s1076, 1
        %s1081 = smul.addr %s1078, 2
        %s1082 = sadd.s32 %s1080, %s1081
        %s1083 = smul.addr %s1082, 8
        %s1084 = scalar_lea.vmem %s2, %s1083
        %s1085 = smul.u32 2, %s56
        %s1086 = smul.u32 2, %s56
        %p1087 = scmp.lt.s32.totalorder %s55, 1
        %s1088 = scalar_select %p1087, %s55, 1
        %p1089 = scmp.lt.s32.totalorder %s1086, 1
        %s1090 = scalar_select %p1089, %s1086, 1
        %s1091 = smul.addr %s1088, 2
        %s1092 = sadd.s32 %s1090, %s1091
        %s1093 = smul.addr %s1092, 8
        %s1094 = scalar_lea.vmem %s3, %s1093
        %s1095 = smul.u32 2, %s56
        %s1096 = smul.u32 2, %s56
        %s1097 = smul.u32 2, %s56
        %s1098 = smul.u32 2, %s56
        %s1099 = smul.u32 2, %s56
        %s1100 = smul.u32 2, %s56
        %s1101 = smul.u32 2, %s56
        %p1102 = scmp.lt.s32.totalorder %s55, 1
        %s1103 = scalar_select %p1102, %s55, 1
        %p1104 = scmp.lt.s32.totalorder %s56, 0
        %s1105 = scalar_select %p1104, %s56, 0
        %s1106 = sadd.s32 %s1105, %s1103
        %s1107 = smul.addr %s1106, 8
        %s1108 = scalar_lea.vmem %s21, %s1107
        %s1109 = smul.u32 2, %s56
        %v1111 = vld [vmem:[%s1064] sm:$0xff]
        %v1112 = vld [vmem:[%s1064 + $0x8] sm:$0xff]
        %v1113 = vpack.c.bf16 %v1112, %v1111
        %v1114 = vld [vmem:[%s1074] sm:$0xff]
        %v1115 = vld [vmem:[%s1074 + $0x8] sm:$0xff]
        %v1116 = vpack.c.bf16 %v1115, %v1114
        %v1117 = vld [vmem:[%s9] sm:$0xf]
        %v1118 = vld [vmem:[%s9 + $0x4] sm:$0xf]
        %v1119 = vld [vmem:[%s9 + $0x8] sm:$0xf]
        %v1120 = vld [vmem:[%s9 + $0xc] sm:$0xf]
        %v1121 = vld [vmem:[#allocation11] sm:$0x3]
        %vm1122 = vcmask 23552
        %v1124 = vsel %vm1122, %v1116, 0
        %vm1126 = vcmask 1040384
        %vm1127 = vcmask 1041408
        %v1128 = vsel %vm1126, 4294967295, 65535
        %v1129 = vsel %vm1127, %v1128, 0
        %v1131 = vand.u32 %v1121, %v1129
        %1133 = vmatprep.subr.bf16.mxu0 0
        %1134 = vmatpush1.bf16.msra.mxu0 0
        %1135 = vmatprep.subr.bf16.mxu0 0
        %1136 = vmatpush1.bf16.msra.mxu0 0
        %1137 = vmatprep.subr.bf16.mxu0 0
        %1138 = vmatpush1.bf16.msra.mxu0 0
        %1139 = vmatprep.subr.bf16.mxu0 0
        %1140 = vmatpush1.bf16.msra.mxu0 0
        %1141 = vmatprep.subr.bf16.mxu0 0
        %1142 = vmatpush1.bf16.msra.mxu0 0
        %1143 = vmatprep.subr.bf16.mxu0 0
        %1144 = vmatpush1.bf16.msra.mxu0 0
        %1145 = vmatprep.subr.bf16.mxu0 0
        %1146 = vmatpush1.bf16.msra.mxu0 0
        %1147 = vmatprep.subr.bf16.mxu0 0
        %1148 = vmatpush1.bf16.msra.mxu0 %v1131
        %1149 = vmatprep.subr.bf16.mxu0 0
        %1150 = vmatpush2.bf16.msra.mxu0 0
        %1151 = vmatprep.subr.bf16.mxu0 0
        %1152 = vmatpush2.bf16.msra.mxu0 0
        %1153 = vmatprep.subr.bf16.mxu0 0
        %1154 = vmatpush2.bf16.msra.mxu0 0
        %1155 = vmatprep.subr.bf16.mxu0 0
        %1156 = vmatpush2.bf16.msra.mxu0 0
        %1157 = vmatprep.subr.bf16.mxu0 0
        %1158 = vmatpush2.bf16.msra.mxu0 0
        %1159 = vmatprep.subr.bf16.mxu0 0
        %1160 = vmatpush2.bf16.msra.mxu0 0
        %1161 = vmatprep.subr.bf16.mxu0 0
        %1162 = vmatpush2.bf16.msra.mxu0 0
        %1163 = vmatprep.subr.bf16.mxu0 0
        %1164 = vmatpush2.bf16.msra.mxu0 0
        %1165 = vmatprep.mubr.bf16.mxu0 0
        %1166 = vmatmul.mubr.bf16.gmra.mxu0 %v1124
        %v1167 = vpop.f32.mrf.mxu0
        %v1168 = vadd.f32 0.0, %v1167
        %v1169 = vpop.f32.mrf.mxu0
        %v1170 = vpop.f32.mrf.mxu0
        %v1171 = vadd.f32 0.0, %v1170
        %v1172 = vpop.f32.mrf.mxu0
        %1173 = vdwg.mxu0
        %v1178 = vunpack.c.l.b16 %v1117
        %v1179 = vunpack.c.l.b16 %v1118
        %v1180 = vunpack.c.l.b16 %v1119
        %v1181 = vunpack.c.l.b16 %v1120
        %v1182 = vpack.c.b16 %v1179, %v1178
        %v1183 = vpack.c.b16 %v1181, %v1180
        %vm1186 = vcmask 261120
        %v1188 = vsel %vm1186, %v1113, 0
        %1190 = vmatprep.subr.bf16.mxu0 0
        %1191 = vmatpush1.bf16.msra.mxu0 0
        %1192 = vmatprep.subr.bf16.mxu0 0
        %1193 = vmatpush1.bf16.msra.mxu0 0
        %1194 = vmatprep.subr.bf16.mxu0 0
        %1195 = vmatpush1.bf16.msra.mxu0 0
        %1196 = vmatprep.subr.bf16.mxu0 0
        %1197 = vmatpush1.bf16.msra.mxu0 0
        %1198 = vmatprep.subr.bf16.mxu0 0
        %1199 = vmatpush1.bf16.msra.mxu0 0
        %1200 = vmatprep.subr.bf16.mxu0 0
        %1201 = vmatpush1.bf16.msra.mxu0 0
        %1202 = vmatprep.subr.bf16.mxu0 0
        %1203 = vmatpush1.bf16.msra.mxu0 %v1183
        %1204 = vmatprep.subr.bf16.mxu0 0
        %1205 = vmatpush1.bf16.msra.mxu0 %v1182
        %1206 = vmatprep.subr.bf16.mxu0 0
        %1207 = vmatpush2.bf16.msra.mxu0 0
        %1208 = vmatprep.subr.bf16.mxu0 0
        %1209 = vmatpush2.bf16.msra.mxu0 0
        %1210 = vmatprep.subr.bf16.mxu0 0
        %1211 = vmatpush2.bf16.msra.mxu0 0
        %1212 = vmatprep.subr.bf16.mxu0 0
        %1213 = vmatpush2.bf16.msra.mxu0 0
        %1214 = vmatprep.subr.bf16.mxu0 0
        %1215 = vmatpush2.bf16.msra.mxu0 0
        %1216 = vmatprep.subr.bf16.mxu0 0
        %1217 = vmatpush2.bf16.msra.mxu0 0
        %1218 = vmatprep.subr.bf16.mxu0 0
        %1219 = vmatpush2.bf16.msra.mxu0 0
        %1220 = vmatprep.subr.bf16.mxu0 0
        %1221 = vmatpush2.bf16.msra.mxu0 0
        %1222 = vmatprep.mubr.bf16.mxu0 0
        %1223 = vmatmul.mubr.bf16.gmra.mxu0 %v1188
        %v1224 = vpop.f32.mrf.mxu0
        %v1225 = vadd.f32 %v1168, %v1224
        %v1226 = vpop.f32.mrf.mxu0
        %v1227 = vpop.f32.mrf.mxu0
        %v1228 = vadd.f32 %v1171, %v1227
        %v1229 = vpop.f32.mrf.mxu0
        %1230 = vdwg.mxu0
        %v1231 = vld [vmem:[%s11] sm:$0x1]
        %v1233 = vlaneseq
        %v1234 = vshrl.u32 %v1233, 7
        %v1235 = vsub.s32 0, %v1234
        %v1236 = vrot.slane %v1231, %v1235
        %v1238 = vadd.f32 %v1225, %v1236
        %v1239 = vadd.f32 %v1228, %v1236
        %v1240 = vld [vmem:[#allocation13] sm:$0x1]
        %v1241 = vld [vmem:[#allocation14] sm:$0x1]
        %v1242 = vlaneseq
        %v1243 = vand.u32 %v1242, 127
        %vm1244 = vcmp.lt.s32.totalorder %v1243, 17
        %v1245 = vsel %vm1244, 1, 0
        %v1246 = vcvt.s32.f32 %v1245
        %v1247 = vmul.f32 %v1238, %v1246
        %v1248 = vmul.f32 %v1239, %v1246
        %1249 = vadd.xlane.f32.xlu0 %v1247
        %v1250 = vpop.xlane.xlu0 %1249
        %1251 = vadd.xlane.f32.xlu0 %v1248
        %v1252 = vpop.xlane.xlu0 %1251
        %v1253 = vrcp.pop 17.0
        %v1254 = vmul.f32 %v1250, %v1253
        %v1255 = vmul.f32 %v1252, %v1253
        %v1256 = vsub.f32 %v1238, %v1254
        %v1257 = vsub.f32 %v1239, %v1255
        %v1258 = vmul.f32 %v1256, %v1246
        %v1259 = vmul.f32 %v1257, %v1246
        %v1260 = vmul.f32 %v1258, %v1258
        %v1261 = vmul.f32 %v1259, %v1259
        %1262 = vadd.xlane.f32.xlu0 %v1260
        %v1263 = vpop.xlane.xlu0 %1262
        %1264 = vadd.xlane.f32.xlu0 %v1261
        %v1265 = vpop.xlane.xlu0 %1264
        %v1266 = vmul.f32 %v1263, %v1253
        %v1267 = vmul.f32 %v1265, %v1253
        %v1268 = vadd.f32 %v1266, 1e-05
        %v1269 = vadd.f32 %v1267, 1e-05
        %v1270 = vrsqrt.pop %v1268
        %v1271 = vrsqrt.pop %v1269
        %v1272 = vmul.f32 %v1258, %v1270
        %v1273 = vmul.f32 %v1259, %v1271
        %v1275 = vlaneseq
        %v1276 = vshrl.u32 %v1275, 7
        %v1277 = vsub.s32 0, %v1276
        %v1278 = vrot.slane %v1240, %v1277
        %v1280 = vmul.f32 %v1272, %v1278
        %v1281 = vmul.f32 %v1273, %v1278
        %v1283 = vlaneseq
        %v1284 = vshrl.u32 %v1283, 7
        %v1285 = vsub.s32 0, %v1284
        %v1286 = vrot.slane %v1241, %v1285
        %v1288 = vadd.f32 %v1280, %v1286
        %v1289 = vadd.f32 %v1281, %v1286
        %v1290 = vmul.f32 %v1288, 0.5
        %v1291 = vmul.f32 %v1289, 0.5
        %v1292 = vmul.f32 %v1288, 0.70710677
        %v1293 = vmul.f32 %v1289, 0.70710677
        %v1294 = verf.f32.pop %v1292
        %v1295 = verf.f32.pop %v1293
        %v1296 = vadd.f32 %v1294, 1.0
        %v1297 = vadd.f32 %v1295, 1.0
        %v1298 = vmul.f32 %v1290, %v1296
        %v1299 = vmul.f32 %v1291, %v1297
        %v1300 = vpack.c.bf16 %v1299, %v1298
        %v1301 = vld [vmem:[%s14] sm:$0xf]
        %v1302 = vld [vmem:[%s14 + $0x4] sm:$0xf]
        %v1303 = vld [vmem:[%s14 + $0x8] sm:$0xf]
        %v1304 = vld [vmem:[%s14 + $0xc] sm:$0xf]
        %v1305 = vld [vmem:[%s14 + $0x10] sm:$0xf]
        %v1306 = vld [vmem:[%s14 + $0x14] sm:$0xf]
        %v1307 = vld [vmem:[%s14 + $0x18] sm:$0xf]
        %v1308 = vld [vmem:[%s14 + $0x1c] sm:$0xf]
        %v1309 = vld [vmem:[%s14 + $0x20] sm:$0xf]
        %v1310 = vld [vmem:[%s14 + $0x24] sm:$0xf]
        %v1311 = vld [vmem:[%s14 + $0x28] sm:$0xf]
        %v1312 = vld [vmem:[%s14 + $0x2c] sm:$0xf]
        %v1313 = vld [vmem:[%s14 + $0x30] sm:$0xf]
        %v1314 = vld [vmem:[%s14 + $0x34] sm:$0xf]
        %v1315 = vld [vmem:[%s14 + $0x38] sm:$0xf]
        %v1316 = vld [vmem:[%s14 + $0x3c] sm:$0xf]
        %v1317 = vld [vmem:[%s15] sm:$0x1]
        %v1319 = vlaneseq
        %v1320 = vshrl.u32 %v1319, 7
        %v1321 = vsub.s32 0, %v1320
        %v1322 = vrot.slane %v1317, %v1321
        %v1340 = vunpack.c.l.b16 %v1301
        %v1341 = vunpack.c.l.b16 %v1302
        %v1342 = vunpack.c.l.b16 %v1303
        %v1343 = vunpack.c.l.b16 %v1304
        %v1344 = vunpack.c.l.b16 %v1305
        %v1345 = vunpack.c.l.b16 %v1306
        %v1346 = vunpack.c.l.b16 %v1307
        %v1347 = vunpack.c.l.b16 %v1308
        %v1348 = vunpack.c.l.b16 %v1309
        %v1349 = vunpack.c.l.b16 %v1310
        %v1350 = vunpack.c.l.b16 %v1311
        %v1351 = vunpack.c.l.b16 %v1312
        %v1352 = vunpack.c.l.b16 %v1313
        %v1353 = vunpack.c.l.b16 %v1314
        %v1354 = vunpack.c.l.b16 %v1315
        %v1355 = vunpack.c.l.b16 %v1316
        %v1356 = vpack.c.b16 %v1341, %v1340
        %v1357 = vpack.c.b16 %v1343, %v1342
        %v1358 = vpack.c.b16 %v1345, %v1344
        %v1359 = vpack.c.b16 %v1347, %v1346
        %v1360 = vpack.c.b16 %v1349, %v1348
        %v1361 = vpack.c.b16 %v1351, %v1350
        %v1362 = vpack.c.b16 %v1353, %v1352
        %v1363 = vpack.c.b16 %v1355, %v1354
        %1372 = vmatprep.subr.bf16.mxu0 0
        %1373 = vmatpush1.bf16.msra.mxu0 %v1363
        %1374 = vmatprep.subr.bf16.mxu0 0
        %1375 = vmatpush1.bf16.msra.mxu0 %v1362
        %1376 = vmatprep.subr.bf16.mxu0 0
        %1377 = vmatpush1.bf16.msra.mxu0 %v1361
        %1378 = vmatprep.subr.bf16.mxu0 0
        %1379 = vmatpush1.bf16.msra.mxu0 %v1360
        %1380 = vmatprep.subr.bf16.mxu0 0
        %1381 = vmatpush1.bf16.msra.mxu0 %v1359
        %1382 = vmatprep.subr.bf16.mxu0 0
        %1383 = vmatpush1.bf16.msra.mxu0 %v1358
        %1384 = vmatprep.subr.bf16.mxu0 0
        %1385 = vmatpush1.bf16.msra.mxu0 %v1357
        %1386 = vmatprep.subr.bf16.mxu0 0
        %1387 = vmatpush1.bf16.msra.mxu0 %v1356
        %1388 = vmatprep.subr.bf16.mxu0 0
        %1389 = vmatpush2.bf16.msra.mxu0 0
        %1390 = vmatprep.subr.bf16.mxu0 0
        %1391 = vmatpush2.bf16.msra.mxu0 0
        %1392 = vmatprep.subr.bf16.mxu0 0
        %1393 = vmatpush2.bf16.msra.mxu0 0
        %1394 = vmatprep.subr.bf16.mxu0 0
        %1395 = vmatpush2.bf16.msra.mxu0 0
        %1396 = vmatprep.subr.bf16.mxu0 0
        %1397 = vmatpush2.bf16.msra.mxu0 0
        %1398 = vmatprep.subr.bf16.mxu0 0
        %1399 = vmatpush2.bf16.msra.mxu0 0
        %1400 = vmatprep.subr.bf16.mxu0 0
        %1401 = vmatpush2.bf16.msra.mxu0 0
        %1402 = vmatprep.subr.bf16.mxu0 0
        %1403 = vmatpush2.bf16.msra.mxu0 0
        %1404 = vmatprep.mubr.bf16.mxu0 0
        %1405 = vmatmul.mubr.bf16.gmra.mxu0 %v1300
        %v1406 = vpop.f32.mrf.mxu0
        %v1407 = vadd.f32 %v1322, %v1406
        %v1408 = vpop.f32.mrf.mxu0
        %v1409 = vpop.f32.mrf.mxu0
        %v1410 = vadd.f32 %v1322, %v1409
        %v1411 = vpop.f32.mrf.mxu0
        %1412 = vdwg.mxu0
        %v1413 = vld [vmem:[%s16] sm:$0x1]
        %v1414 = vld [vmem:[%s17] sm:$0x1]
        %vm1415 = vcmask 56320
        %v1416 = vsel %vm1415, %v1407, 0.0
        %1417 = vadd.xlane.f32.xlu0 %v1416
        %v1418 = vpop.xlane.xlu0 %1417
        %v1419 = vsel %vm1415, %v1410, 0.0
        %1420 = vadd.xlane.f32.xlu0 %v1419
        %v1421 = vpop.xlane.xlu0 %1420
        %v1422 = vrcp.pop 7.0
        %v1423 = vmul.f32 %v1418, %v1422
        %v1424 = vmul.f32 %v1421, %v1422
        %v1425 = vsub.f32 %v1407, %v1423
        %v1426 = vsub.f32 %v1410, %v1424
        %v1427 = vmul.f32 %v1425, %v1425
        %v1428 = vmul.f32 %v1426, %v1426
        %v1429 = vsel %vm1415, %v1427, 0.0
        %1430 = vadd.xlane.f32.xlu0 %v1429
        %v1431 = vpop.xlane.xlu0 %1430
        %v1432 = vsel %vm1415, %v1428, 0.0
        %1433 = vadd.xlane.f32.xlu0 %v1432
        %v1434 = vpop.xlane.xlu0 %1433
        %v1435 = vmul.f32 %v1431, %v1422
        %v1436 = vmul.f32 %v1434, %v1422
        %v1437 = vadd.f32 %v1435, 1e-05
        %v1438 = vadd.f32 %v1436, 1e-05
        %v1439 = vrsqrt.pop %v1437
        %v1440 = vrsqrt.pop %v1438
        %v1441 = vmul.f32 %v1425, %v1439
        %v1442 = vmul.f32 %v1426, %v1440
        %v1444 = vlaneseq
        %v1445 = vshrl.u32 %v1444, 7
        %v1446 = vsub.s32 0, %v1445
        %v1447 = vrot.slane %v1413, %v1446
        %v1449 = vmul.f32 %v1441, %v1447
        %v1450 = vmul.f32 %v1442, %v1447
        %v1452 = vlaneseq
        %v1453 = vshrl.u32 %v1452, 7
        %v1454 = vsub.s32 0, %v1453
        %v1455 = vrot.slane %v1414, %v1454
        %v1457 = vadd.f32 %v1449, %v1455
        %v1458 = vadd.f32 %v1450, %v1455
        %v1459 = vsel %vm1415, %v1457, -inf
        %1460 = vmax.xlane.f32.xlu0 %v1459
        %v1461 = vpop.xlane.xlu0 %1460
        %v1462 = vsel %vm1415, %v1458, -inf
        %1463 = vmax.xlane.f32.xlu0 %v1462
        %v1464 = vpop.xlane.xlu0 %1463
        %v1465 = vsub.f32 %v1457, %v1461
        %v1466 = vsub.f32 %v1458, %v1464
        %v1467 = vmul.f32 %v1465, 1.442695
        %v1468 = vpow.pop %v1467
        %v1469 = vmul.f32 %v1466, 1.442695
        %v1470 = vpow.pop %v1469
        %v1471 = vsel %vm1415, %v1468, 0.0
        %1472 = vadd.xlane.f32.xlu0 %v1471
        %v1473 = vpop.xlane.xlu0 %1472
        %v1474 = vsel %vm1415, %v1470, 0.0
        %1475 = vadd.xlane.f32.xlu0 %v1474
        %v1476 = vpop.xlane.xlu0 %1475
        %v1477 = vrcp.pop %v1473
        %v1478 = vmul.f32 %v1468, %v1477
        %v1479 = vrcp.pop %v1476
        %v1480 = vmul.f32 %v1470, %v1479
        %1481 = vxpose.xlu0.b32.start [1/16] %v1478, 128
        %1482 = vxpose.xlu0.b32.cont [2/16] %v1480, 128
        %1483 = vxpose.xlu0.b32.cont [3/16] 0.0, 128
        %1484 = vxpose.xlu0.b32.cont [4/16] 0.0, 128
        %1485 = vxpose.xlu0.b32.cont [5/16] 0.0, 128
        %1486 = vxpose.xlu0.b32.cont [6/16] 0.0, 128
        %1487 = vxpose.xlu0.b32.cont [7/16] 0.0, 128
        %1488 = vxpose.xlu0.b32.cont [8/16] 0.0, 128
        %1489 = vxpose.xlu0.b32.cont [9/16] 0.0, 128
        %1490 = vxpose.xlu0.b32.cont [10/16] 0.0, 128
        %1491 = vxpose.xlu0.b32.cont [11/16] 0.0, 128
        %1492 = vxpose.xlu0.b32.cont [12/16] 0.0, 128
        %1493 = vxpose.xlu0.b32.cont [13/16] 0.0, 128
        %1494 = vxpose.xlu0.b32.cont [14/16] 0.0, 128
        %1495 = vxpose.xlu0.b32.cont [15/16] 0.0, 128
        %1496 = vxpose.xlu0.b32.end [16/16] 0.0, 128
        %v1497 = vpop.trf.xlu0
        %v1498 = vpop.trf.xlu0
        %v1499 = vpop.trf.xlu0
        %v1500 = vpop.trf.xlu0
        %v1501 = vpop.trf.xlu0
        %v1502 = vpop.trf.xlu0
        %v1503 = vpop.trf.xlu0
        %v1504 = vpop.trf.xlu0
        %v1505 = vpop.trf.xlu0
        %v1506 = vpop.trf.xlu0
        %v1507 = vpop.trf.xlu0
        %v1508 = vpop.trf.xlu0
        %v1509 = vpop.trf.xlu0
        %v1510 = vpop.trf.xlu0
        %v1511 = vpop.trf.xlu0
        %v1512 = vpop.trf.xlu0
        %vm1513 = vcmask 129024
        %1514 = vst.msk [vmem:[%s1108] sm:$0x7f] %vm1513, %v1497
        %v1515 = vld [vmem:[%s1084] sm:$0xff]
        %v1516 = vld [vmem:[%s1084 + $0x8] sm:$0xff]
        %1518 = vset.pattern.permute.xlu0 0
        %1519 = vperm.xlu0 %1518, %v1478
        %v1520 = vpop.permute.xlu0 %1519
        %1523 = vset.pattern.permute.xlu0 0
        %1524 = vperm.xlu0 %1523, %v1480
        %v1525 = vpop.permute.xlu0 %1524
        %v1527 = vmul.f32 %v1515, %v1520
        %v1528 = vmul.f32 %v1516, %v1525
        %v1529 = vld [vmem:[%s1094] sm:$0xff]
        %v1530 = vld [vmem:[%s1094 + $0x8] sm:$0xff]
        %1531 = vset.pattern.permute.xlu0 1
        %1532 = vperm.xlu0 %1531, %v1478
        %v1533 = vpop.permute.xlu0 %1532
        %1535 = vset.pattern.permute.xlu0 1
        %1536 = vperm.xlu0 %1535, %v1480
        %v1537 = vpop.permute.xlu0 %1536
        %v1539 = vmul.f32 %v1529, %v1533
        %v1540 = vmul.f32 %v1530, %v1537
        %v1541 = vadd.f32 %v1527, %v1539
        %v1542 = vadd.f32 %v1528, %v1540
        %v1543 = vld [vmem:[%s879] sm:$0xff]
        %v1544 = vld [vmem:[%s879 + $0x8] sm:$0xff]
        %1545 = vset.pattern.permute.xlu0 2
        %1546 = vperm.xlu0 %1545, %v1478
        %v1547 = vpop.permute.xlu0 %1546
        %1549 = vset.pattern.permute.xlu0 2
        %1550 = vperm.xlu0 %1549, %v1480
        %v1551 = vpop.permute.xlu0 %1550
        %v1553 = vmul.f32 %v1543, %v1547
        %v1554 = vmul.f32 %v1544, %v1551
        %v1555 = vadd.f32 %v1541, %v1553
        %v1556 = vadd.f32 %v1542, %v1554
        %v1557 = vld [vmem:[%s888] sm:$0xff]
        %v1558 = vld [vmem:[%s888 + $0x8] sm:$0xff]
        %1559 = vset.pattern.permute.xlu0 3
        %1560 = vperm.xlu0 %1559, %v1478
        %v1561 = vpop.permute.xlu0 %1560
        %1563 = vset.pattern.permute.xlu0 3
        %1564 = vperm.xlu0 %1563, %v1480
        %v1565 = vpop.permute.xlu0 %1564
        %v1567 = vmul.f32 %v1557, %v1561
        %v1568 = vmul.f32 %v1558, %v1565
        %v1569 = vadd.f32 %v1555, %v1567
        %v1570 = vadd.f32 %v1556, %v1568
        %v1571 = vld [vmem:[%s897] sm:$0xff]
        %v1572 = vld [vmem:[%s897 + $0x8] sm:$0xff]
        %1573 = vset.pattern.permute.xlu0 4
        %1574 = vperm.xlu0 %1573, %v1478
        %v1575 = vpop.permute.xlu0 %1574
        %1577 = vset.pattern.permute.xlu0 4
        %1578 = vperm.xlu0 %1577, %v1480
        %v1579 = vpop.permute.xlu0 %1578
        %v1581 = vmul.f32 %v1571, %v1575
        %v1582 = vmul.f32 %v1572, %v1579
        %v1583 = vadd.f32 %v1569, %v1581
        %v1584 = vadd.f32 %v1570, %v1582
        %v1585 = vld [vmem:[%s906] sm:$0xff]
        %v1586 = vld [vmem:[%s906 + $0x8] sm:$0xff]
        %1587 = vset.pattern.permute.xlu0 5
        %1588 = vperm.xlu0 %1587, %v1478
        %v1589 = vpop.permute.xlu0 %1588
        %1591 = vset.pattern.permute.xlu0 5
        %1592 = vperm.xlu0 %1591, %v1480
        %v1593 = vpop.permute.xlu0 %1592
        %v1595 = vmul.f32 %v1585, %v1589
        %v1596 = vmul.f32 %v1586, %v1593
        %v1597 = vadd.f32 %v1583, %v1595
        %v1598 = vadd.f32 %v1584, %v1596
        %v1599 = vld [vmem:[%s915] sm:$0xff]
        %v1600 = vld [vmem:[%s915 + $0x8] sm:$0xff]
        %1601 = vset.pattern.permute.xlu0 6
        %1602 = vperm.xlu0 %1601, %v1478
        %v1603 = vpop.permute.xlu0 %1602
        %1605 = vset.pattern.permute.xlu0 6
        %1606 = vperm.xlu0 %1605, %v1480
        %v1607 = vpop.permute.xlu0 %1606
        %v1609 = vmul.f32 %v1599, %v1603
        %v1610 = vmul.f32 %v1600, %v1607
        %v1611 = vadd.f32 %v1597, %v1609
        %v1612 = vadd.f32 %v1598, %v1610
        %1613 = vst.msk [vmem:[%s1039] sm:$0xff] %vm1186, %v1611
        %1614 = vst.msk [vmem:[%s1039 + $0x8] sm:$0xff] %vm1186, %v1612
        %v1615 = vpack.c.bf16 %v1612, %v1611
        %v1616 = vld [vmem:[%s18] sm:$0xf]
        %v1617 = vld [vmem:[%s18 + $0x4] sm:$0xf]
        %v1618 = vld [vmem:[%s18 + $0x8] sm:$0xf]
        %v1619 = vld [vmem:[%s18 + $0xc] sm:$0xf]
        %v1620 = vld [vmem:[%s19] sm:$0x1]
        %v1622 = vlaneseq
        %v1623 = vshrl.u32 %v1622, 7
        %v1624 = vsub.s32 0, %v1623
        %v1625 = vrot.slane %v1620, %v1624
        %v1631 = vunpack.c.l.b16 %v1616
        %v1632 = vunpack.c.l.b16 %v1617
        %v1633 = vunpack.c.l.b16 %v1618
        %v1634 = vunpack.c.l.b16 %v1619
        %v1635 = vpack.c.b16 %v1632, %v1631
        %v1636 = vpack.c.b16 %v1634, %v1633
        %v1640 = vsel %vm1186, %v1615, 0
        %1642 = vmatprep.subr.bf16.mxu0 0
        %1643 = vmatpush1.bf16.msra.mxu0 0
        %1644 = vmatprep.subr.bf16.mxu0 0
        %1645 = vmatpush1.bf16.msra.mxu0 0
        %1646 = vmatprep.subr.bf16.mxu0 0
        %1647 = vmatpush1.bf16.msra.mxu0 0
        %1648 = vmatprep.subr.bf16.mxu0 0
        %1649 = vmatpush1.bf16.msra.mxu0 0
        %1650 = vmatprep.subr.bf16.mxu0 0
        %1651 = vmatpush1.bf16.msra.mxu0 0
        %1652 = vmatprep.subr.bf16.mxu0 0
        %1653 = vmatpush1.bf16.msra.mxu0 0
        %1654 = vmatprep.subr.bf16.mxu0 0
        %1655 = vmatpush1.bf16.msra.mxu0 %v1636
        %1656 = vmatprep.subr.bf16.mxu0 0
        %1657 = vmatpush1.bf16.msra.mxu0 %v1635
        %1658 = vmatprep.subr.bf16.mxu0 0
        %1659 = vmatpush2.bf16.msra.mxu0 0
        %1660 = vmatprep.subr.bf16.mxu0 0
        %1661 = vmatpush2.bf16.msra.mxu0 0
        %1662 = vmatprep.subr.bf16.mxu0 0
        %1663 = vmatpush2.bf16.msra.mxu0 0
        %1664 = vmatprep.subr.bf16.mxu0 0
        %1665 = vmatpush2.bf16.msra.mxu0 0
        %1666 = vmatprep.subr.bf16.mxu0 0
        %1667 = vmatpush2.bf16.msra.mxu0 0
        %1668 = vmatprep.subr.bf16.mxu0 0
        %1669 = vmatpush2.bf16.msra.mxu0 0
        %1670 = vmatprep.subr.bf16.mxu0 0
        %1671 = vmatpush2.bf16.msra.mxu0 0
        %1672 = vmatprep.subr.bf16.mxu0 0
        %1673 = vmatpush2.bf16.msra.mxu0 0
        %1674 = vmatprep.mubr.bf16.mxu0 0
        %1675 = vmatmul.mubr.bf16.gmra.mxu0 %v1640
        %v1676 = vpop.f32.mrf.mxu0
        %v1677 = vadd.f32 %v1625, %v1676
        %v1678 = vpop.f32.mrf.mxu0
        %v1679 = vpop.f32.mrf.mxu0
        %v1680 = vadd.f32 %v1625, %v1679
        %v1681 = vpop.f32.mrf.mxu0
        %1682 = vdwg.mxu0
        %v1683 = vpack.c.bf16 %v1680, %v1677
        %v1685 = vunpack.c.l.b16 %v1683
        %v1686 = vunpack.c.h.b16 %v1683
        %v1687 = vpack.c.b16 %v1685, %v1685
        %v1688 = vpack.c.b16 %v1686, %v1686
        %vm1691 = vcmask 519168
        %1692 = vst.msk [vmem:[%s1055] sm:$0xf] %vm1691, %v1687
        %1693 = vst.msk [vmem:[%s1055 + $0x4] sm:$0xf] %vm1691, %v1688
        %s1694 = sand.u32 %s556, 1
        %s1695 = scalar_lea.sflag [#allocation4], %s1694
        %s1696 = sand.u32 %s556, 1
        %s1697 = smul.addr %s1696, 16
        %s1698 = scalar_lea.vmem [#allocation16], %s1697
        %p1699 = scmp.lt.s32.totalorder %s55, 1
        %s1700 = scalar_select %p1699, %s55, 1
        %p1701 = scmp.lt.s32.totalorder %s56, 0
        %s1702 = scalar_select %p1701, %s56, 0
        %s1703 = sadd.s32 %s1702, %s1700
        %s1704 = smul.addr %s1703, 8
        %s1705 = scalar_lea.vmem %s21, %s1704
        %s1706 = sand.u32 %s612, 1
        %s1707 = scalar_lea.sflag [#allocation18], %s1706
        %s1708 = sand.u32 %s612, 1
        %s1709 = smul.addr %s1708, 8
        %s1710 = scalar_lea.vmem [#allocation17], %s1709
        // Predicated region
        $region133: #{tpu_custom_call.1} parent=99 // pred_check
          %p1711 = pneg %p566
        $region134: #{tpu_custom_call.1} parent=99 // pred_check_branch
          %1713 = sbr.rel (%p1711) target = $region136
        $region135: #{tpu_custom_call.1} parent=99 // pred_region
          %s1714 = smul.u32 2, %s56
          %s1716 = ssub.s32 256, 256
          %1717 = vsyncadd %s1695, %s1716
          %s1718 = smul.addr %s55, 2
          %s1719 = sadd.s32 %s1714, %s1718
          %s1720 = smul.addr %s1719, 128
          %s1721 = scalar_lea.hbm %s20, %s1720
          %s1722 = sshll.u32 %s1698, 4
          %s1723 = int_to_ptr.vmem [resolvable:$true] %s1722
          %1728 = dma.vmem_to_hbm [thread:$0]  %s1723, 256, %s1721, %s1695, 128, 128, 8
        $region136: #{tpu_custom_call.1} parent=99 // pred_fallthru
          _
        // Predicated region
        $region137: #{tpu_custom_call.1} parent=99 // pred_check
          %p1729 = pneg %p594
        $region138: #{tpu_custom_call.1} parent=99 // pred_check_branch
          %1731 = sbr.rel (%p1729) target = $region140
        $region139: #{tpu_custom_call.1} parent=99 // pred_region
          _
        $region140: #{tpu_custom_call.1} parent=99 // pred_fallthru
          _
        // Predicated region
        $region141: #{tpu_custom_call.1} parent=99 // pred_check
          %p1732 = pneg %p622
        $region142: #{tpu_custom_call.1} parent=99 // pred_check_branch
          %1734 = sbr.rel (%p1732) target = $region144
        $region143: #{tpu_custom_call.1} parent=99 // pred_region
          %s1735 = smul.u32 2, %s56
          %s1737 = ssub.s32 128, 128
          %1738 = vsyncadd %s1707, %s1737
          %s1739 = smul.addr %s55, 2
          %s1740 = sadd.s32 %s1735, %s1739
          %s1741 = smul.addr %s1740, 64
          %s1742 = scalar_lea.hbm %s22, %s1741
          %s1743 = sshll.u32 %s1710, 4
          %s1744 = int_to_ptr.vmem [resolvable:$true] %s1743
          %1749 = dma.vmem_to_hbm [thread:$0]  %s1744, 128, %s1742, %s1707, 64, 64, 4
        $region144: #{tpu_custom_call.1} parent=99 // pred_fallthru
          _
      $region100: #{tpu_custom_call.1} parent=5 // pred_fallthru
        _
      %p1750 = scmp.le.s32.totalorder 2, %s46
      // Predicated region
      $region145: #{tpu_custom_call.1} parent=5 // pred_check
        %p1751 = pneg %p1750
      $region146: #{tpu_custom_call.1} parent=5 // pred_check_branch
        %1753 = sbr.rel (%p1751) target = $region148
      $region147: #{tpu_custom_call.1} parent=5 // pred_region
        %s1754 = ssub.s32 %s46, 2
        // Predicated region
        $region149: #{tpu_custom_call.1} parent=147 // pred_check
          %p1755 = pneg %p572
        $region150: #{tpu_custom_call.1} parent=147 // pred_check_branch
          %1757 = sbr.rel (%p1755) target = $region152
        $region151: #{tpu_custom_call.1} parent=147 // pred_region
          %s1758 = sand.u32 %s557, 1
          %s1759 = scalar_lea.sflag [#allocation4], %s1758
          %s1760 = sand.u32 %s557, 1
          %s1761 = smul.addr %s1760, 16
          %s1762 = scalar_lea.vmem [#allocation16], %s1761
          %1763 = dma.done %s1759, 256
        $region152: #{tpu_custom_call.1} parent=147 // pred_fallthru
          _
        // Predicated region
        $region153: #{tpu_custom_call.1} parent=147 // pred_check
          %p1764 = pneg %p600
        $region154: #{tpu_custom_call.1} parent=147 // pred_check_branch
          %1766 = sbr.rel (%p1764) target = $region156
        $region155: #{tpu_custom_call.1} parent=147 // pred_region
          %p1767 = scmp.lt.s32.totalorder %s57, 1
          %s1768 = scalar_select %p1767, %s57, 1
          %p1769 = scmp.lt.s32.totalorder %s58, 0
          %s1770 = scalar_select %p1769, %s58, 0
          %s1771 = sadd.s32 %s1770, %s1768
          %s1772 = smul.addr %s1771, 8
          %s1773 = scalar_lea.vmem %s21, %s1772
        $region156: #{tpu_custom_call.1} parent=147 // pred_fallthru
          _
        // Predicated region
        $region157: #{tpu_custom_call.1} parent=147 // pred_check
          %p1774 = pneg %p628
        $region158: #{tpu_custom_call.1} parent=147 // pred_check_branch
          %1776 = sbr.rel (%p1774) target = $region160
        $region159: #{tpu_custom_call.1} parent=147 // pred_region
          %s1777 = sand.u32 %s613, 1
          %s1778 = scalar_lea.sflag [#allocation18], %s1777
          %s1779 = sand.u32 %s613, 1
          %s1780 = smul.addr %s1779, 8
          %s1781 = scalar_lea.vmem [#allocation17], %s1780
          %1782 = dma.done %s1778, 128
        $region160: #{tpu_custom_call.1} parent=147 // pred_fallthru
          _
      $region148: #{tpu_custom_call.1} parent=5 // pred_fallthru
        _
    $region6: #{tpu_custom_call.1} parent=1 // loop_footer
      %s50 = sadd.s32 1, %s46
    $region7: #{tpu_custom_call.1} parent=1 // loop_footer_branch
      %45 = sbr.rel target = $region3
    $region8: #{tpu_custom_call.1} parent=1 // loop_exit
      _
    %1783 = vsyncpa [#allocation3], 1
    %s1784 = scalar_lea.sflag [#allocation3], 1
    %1785 = vsyncpa %s1784, 1
    %1786 = vsyncpa [#allocation6], 1
    %s1787 = scalar_lea.sflag [#allocation6], 1
    %1788 = vsyncpa %s1787, 1
    %1789 = vsyncpa [#allocation9], 1
    %s1790 = scalar_lea.sflag [#allocation9], 1
    %1791 = vsyncpa %s1790, 1
    %1792 = vsyncpa [#allocation12], 1
    %1793 = vsyncpa [#allocation15], 1
    %1794 = vsyncpa [#allocation4], 1
    %s1795 = scalar_lea.sflag [#allocation4], 1
    %1796 = vsyncpa %s1795, 1
    %1797 = vsyncpa [#allocation18], 1
    %s1798 = scalar_lea.sflag [#allocation18], 1
    %1799 = vsyncpa %s1798, 1

</llo_original>
